<compile_context>
chip_gen: v6e
topology: v6e:2x2x1
jax: 0.10.0
libtpu: 0.0.40
codegen_flags: <defaults>
</compile_context>

<pallas_src>
import functools
import math

import jax
import jax.numpy as jnp
from jax.experimental import pallas as pl
from jax.experimental.pallas import tpu as pltpu

_LANE = 128


def _round_up(v, m):
    return (v + m - 1) // m * m


def _divisors_desc(m):
    return sorted((d for d in range(1, m + 1) if m % d == 0), reverse=True)


def _vmem_capacity_bytes():
    try:
        info = pltpu.get_tpu_info()
        cap = int(getattr(info, "vmem_capacity_bytes", 0) or 0)
        if cap > 0:
            return cap
    except Exception:
        pass
    return 64 << 20  # conservative fallback if the chip can't be queried


# ---------------------------------------------------------------------------
# Kernel bodies
# ---------------------------------------------------------------------------
def _gcn_kernel_inplace(x_ref, adj_ref, w_ref, b_ref, o_ref, support_ref, *, single_k):
    """adj @ (x @ w) + bias, accumulating directly in the resident output block.

    Used when the k (node-reduction) grid axis has a single step, or when the
    output dtype is float32 (in-place accumulation loses no precision).
    """
    i = pl.program_id(1)
    k = pl.program_id(2)
    tk = adj_ref.shape[1]
    k_off = pl.multiple_of(k * tk, tk)

    # Materialize this k-slice of support = x @ w once per batch (i == 0); it
    # stays resident in VMEM for all later row tiles of the same batch.
    @pl.when(i == 0)
    def _():
        s = jnp.dot(x_ref[...].astype(w_ref.dtype), w_ref[...],
                    preferred_element_type=jnp.float32)
        support_ref[pl.ds(k_off, tk), :] = s.astype(support_ref.dtype)

    # Cast the adj tile in VMEM (no extra HBM traffic) so the MXU sees matching
    # operand dtypes (bf16 x bf16 on the fast path, f32 x f32 otherwise).
    adj_t = adj_ref[...].astype(support_ref.dtype)
    part = jnp.dot(adj_t, support_ref[pl.ds(k_off, tk), :],
                   preferred_element_type=jnp.float32)

    if single_k:
        o_ref[...] = (part + b_ref[...]).astype(o_ref.dtype)
    else:
        @pl.when(k == 0)
        def _():
            o_ref[...] = (part + b_ref[...]).astype(o_ref.dtype)

        @pl.when(k > 0)
        def _():
            o_ref[...] = (o_ref[...].astype(jnp.float32) + part).astype(o_ref.dtype)


def _gcn_kernel_acc(x_ref, adj_ref, w_ref, b_ref, o_ref, support_ref, acc_ref):
    """Variant with an explicit f32 accumulator (multi-k grid + non-f32 output)."""
    i = pl.program_id(1)
    k = pl.program_id(2)
    num_k = pl.num_programs(2)
    tk = adj_ref.shape[1]
    k_off = pl.multiple_of(k * tk, tk)

    @pl.when(i == 0)
    def _():
        s = jnp.dot(x_ref[...].astype(w_ref.dtype), w_ref[...],
                    preferred_element_type=jnp.float32)
        support_ref[pl.ds(k_off, tk), :] = s.astype(support_ref.dtype)

    @pl.when(k == 0)
    def _():
        acc_ref[...] = jnp.zeros_like(acc_ref)

    adj_t = adj_ref[...].astype(support_ref.dtype)
    acc_ref[...] += jnp.dot(adj_t, support_ref[pl.ds(k_off, tk), :],
                            preferred_element_type=jnp.float32)

    @pl.when(k == num_k - 1)
    def _():
        o_ref[...] = (acc_ref[...] + b_ref[...]).astype(o_ref.dtype)


# ---------------------------------------------------------------------------
# Wrapper
# ---------------------------------------------------------------------------
def graph_convolution(x, adj, weight, bias=None, *, use_bf16=False):
    """Pallas GCN forward.

    x: [B, N, Fin], adj: [B, N, N], weight: [Fin, Fout],
    bias: [1, 1, Fout] or None.  Returns [B, N, Fout] in x.dtype.
    """
    B, N, Fin = x.shape
    Fout = weight.shape[1]
    assert weight.shape == (Fin, Fout)
    assert adj.shape == (B, N, N)
    out_dtype = x.dtype
    compute_dtype = jnp.bfloat16 if use_bf16 else jnp.float32

    # ---- padded / tiled geometry -------------------------------------------
    n_pad = _round_up(N, _LANE)
    # If a padded adj copy is unavoidable anyway (N not lane aligned) and N is
    # large, bump padding to a 256 multiple so the 256x256 MXU tile is usable.
    if n_pad % 256 != 0 and N % _LANE != 0 and N >= 1024:
        n_pad = _round_up(N, 256)
    tn = 256 if n_pad % 256 == 0 else _LANE
    fin_p = _round_up(Fin, _LANE)    # Fin untiled: one MXU contraction
    fout_p = _round_up(Fout, _LANE)  # lane-dense output (multiple of 128)

    # ---- adj: do NOT copy in the wrapper unless padding is unavoidable ------
    if n_pad == N:
        adj_p = adj  # zero-copy: dominant HBM stream is read exactly once
    else:
        # TODO(synk): handle the ragged last node tile in-kernel (masked edge
        # tile) instead of materializing a padded HBM copy of adj.
        adj_p = jnp.pad(adj, ((0, 0), (0, n_pad - N), (0, n_pad - N)))

    # x / weight / bias are small relative to adj; pad (and cast) as needed.
    if n_pad == N and fin_p == Fin and x.dtype == compute_dtype:
        x_p = x
    else:
        x_p = jnp.pad(x, ((0, 0), (0, n_pad - N), (0, fin_p - Fin))).astype(compute_dtype)
    w_p = jnp.pad(weight, ((0, fin_p - Fin), (0, fout_p - Fout))).astype(compute_dtype)
    if bias is None:
        b_p = jnp.zeros((1, fout_p), jnp.float32)
    else:
        b_p = jnp.pad(bias.reshape(1, Fout).astype(jnp.float32),
                      ((0, 0), (0, fout_p - Fout)))

    # ---- generation-aware VMEM budget, TK / support-dtype selection ---------
    vmem_cap = _vmem_capacity_bytes()
    # ~108 MiB usable on v5e/v6e (128 MiB physical), ~54 MiB on v7x (64 MiB).
    vmem_budget = max(min(int(vmem_cap * 0.85), vmem_cap - (8 << 20)), 24 << 20)

    adj_item = jnp.dtype(adj_p.dtype).itemsize
    x_item = jnp.dtype(x_p.dtype).itemsize
    c_item = jnp.dtype(compute_dtype).itemsize
    o_item = jnp.dtype(out_dtype).itemsize

    def _footprint(tk, sup_item):
        return (2 * tn * tk * adj_item          # adj tile, double-buffered
                + 2 * tk * fin_p * x_item       # x tile, double-buffered
                + fin_p * fout_p * c_item       # weights, single-buffered
                + fout_p * 4                    # bias, single-buffered
                + 2 * tn * fout_p * o_item      # output tile, double-buffered
                + n_pad * fout_p * sup_item     # persistent support scratch
                + tn * fout_p * 4)              # (optional) f32 accumulator

    sup_candidates = [jnp.bfloat16] if use_bf16 else [jnp.float32, jnp.bfloat16]
    tk = None
    support_dtype = None
    for d in _divisors_desc(n_pad // tn):       # largest TK first (TK = n_pad ideal)
        cand_tk = d * tn
        for sd in sup_candidates:               # prefer f32 support if it fits
            if _footprint(cand_tk, jnp.dtype(sd).itemsize) <= vmem_budget:
                tk, support_dtype = cand_tk, sd
                break
        if tk is not None:
            break
    if tk is None:
        # TODO(synk): for huge N*Fout add an Fout grid axis (or recompute x@w
        # per row tile) instead of relying on the compiler to spill.
        tk, support_dtype = tn, jnp.bfloat16

    num_i = n_pad // tn
    num_k = n_pad // tk
    use_acc_scratch = (num_k > 1) and (out_dtype != jnp.float32)

    vmem_est = _footprint(tk, jnp.dtype(support_dtype).itemsize)
    vmem_limit = int(min(max(int(vmem_est * 1.5) + (2 << 20), 32 << 20), vmem_budget))

    cost = pl.CostEstimate(
        flops=2 * B * N * Fin * Fout + 2 * B * N * N * Fout,
        transcendentals=0,
        bytes_accessed=int(adj_p.size) * adj_item + int(x_p.size) * x_item
        + int(w_p.size) * c_item + B * n_pad * fout_p * o_item,
    )

    # ---- block specs ---------------------------------------------------------
    # x is only consumed while i == 0 (support materialization); pin its block
    # index to (b, 0, 0) afterwards so the pipeline skips redundant re-DMAs.
    x_spec = pl.BlockSpec(
        (pl.Squeezed(), tk, fin_p),
        lambda b, i, k: (b, k * jnp.maximum(1 - i, 0), 0))
    adj_spec = pl.BlockSpec((pl.Squeezed(), tn, tk), lambda b, i, k: (b, i, k))
    o_spec = pl.BlockSpec((pl.Squeezed(), tn, fout_p), lambda b, i, k: (b, i, 0))

    if use_acc_scratch:
        kernel = _gcn_kernel_acc
        scratch = [pltpu.VMEM((n_pad, fout_p), support_dtype),
                   pltpu.VMEM((tn, fout_p), jnp.float32)]
    else:
        kernel = functools.partial(_gcn_kernel_inplace, single_k=(num_k == 1))
        scratch = [pltpu.VMEM((n_pad, fout_p), support_dtype)]

    def _build(resident_buffers):
        extra = {}
        if resident_buffers == 1:
            # Weights / bias never change block index: single-buffer them.
            extra = dict(pipeline_mode=pl.Buffered(1))
        w_spec = pl.BlockSpec((fin_p, fout_p), lambda b, i, k: (0, 0), **extra)
        b_spec = pl.BlockSpec((1, fout_p), lambda b, i, k: (0, 0), **extra)
        return pl.pallas_call(
            kernel,
            out_shape=jax.ShapeDtypeStruct((B, n_pad, fout_p), out_dtype),
            grid_spec=pltpu.PrefetchScalarGridSpec(
                num_scalar_prefetch=0,
                grid=(B, num_i, num_k),
                in_specs=[x_spec, adj_spec, w_spec, b_spec],
                out_specs=o_spec,
                scratch_shapes=scratch,
            ),
            compiler_params=pltpu.CompilerParams(
                # Batch axis is megacore-parallel; i/k stay sequential because
                # the resident support scratch is shared across a batch's tiles.
                dimension_semantics=("parallel", "arbitrary", "arbitrary"),
                vmem_limit_bytes=vmem_limit,
            ),
            cost_estimate=cost,
        )

    try:
        out_p = _build(1)(x_p, adj_p, w_p, b_p)
    except Exception:
        # Fallback if single-buffering (pl.Buffered(1)) is rejected by this
        # jax/Mosaic version: use default double-buffered specs.
        out_p = _build(2)(x_p, adj_p, w_p, b_p)

    return out_p[:, :N, :Fout]


# ---------------------------------------------------------------------------
# Self-test
# ---------------------------------------------------------------------------
if __name__ == "__main__":
    key = jax.random.PRNGKey(0)

    def reference(x, adj, w, b=None):
        support = jnp.einsum("bnf,fo->bno", x, w, precision=jax.lax.Precision.HIGHEST)
        out = jnp.einsum("bnm,bmo->bno", adj, support, precision=jax.lax.Precision.HIGHEST)
        return out if b is None else out + b

    # ---- small shapes consistent with the module forward --------------------
    B, N, Fin, Fout = 2, 8, 16, 32
    k_x, k_adj, k_w, k_b, key = jax.random.split(key, 5)
    stdv = 1.0 / math.sqrt(Fout)
    x = jax.random.normal(k_x, (B, N, Fin), dtype=jnp.float32)
    adj = jax.random.uniform(k_adj, (B, N, N), dtype=jnp.float32)
    weight = jax.random.uniform(k_w, (Fin, Fout), jnp.float32, minval=-stdv, maxval=stdv)
    bias = jax.random.uniform(k_b, (1, 1, Fout), jnp.float32, minval=-stdv, maxval=stdv)

    out_nb = graph_convolution(x, adj, weight, bias=None)           # bias=False (default)
    out_b = graph_convolution(x, adj, weight, bias=bias)            # bias=True
    out_bf16 = graph_convolution(x, adj, weight, bias=bias, use_bf16=True)
    jax.block_until_ready((out_nb, out_b, out_bf16))

    assert out_nb.shape == (B, N, Fout)
    assert jnp.allclose(out_nb, reference(x, adj, weight), atol=1e-3, rtol=1e-3)
    assert jnp.allclose(out_b, reference(x, adj, weight, bias), atol=1e-3, rtol=1e-3)
    assert jnp.allclose(out_bf16, reference(x, adj, weight, bias), atol=1e-1, rtol=5e-2)

    # ---- lane-aligned N: exercises the zero-copy adj fast path ---------------
    B1, N1, Fin1, Fout1 = 2, 128, 16, 32
    k_x, k_adj, k_w, key = jax.random.split(key, 4)
    x1 = jax.random.normal(k_x, (B1, N1, Fin1), dtype=jnp.float32)
    adj1 = jax.random.uniform(k_adj, (B1, N1, N1), dtype=jnp.float32)
    w1 = jax.random.uniform(k_w, (Fin1, Fout1), jnp.float32, minval=-stdv, maxval=stdv)
    out1 = graph_convolution(x1, adj1, w1)
    jax.block_until_ready(out1)
    assert out1.shape == (B1, N1, Fout1)
    assert jnp.allclose(out1, reference(x1, adj1, w1), atol=5e-3, rtol=1e-3)

    # ---- larger, non-aligned shapes: padding + multi-row-tile grid -----------
    B2, N2, Fin2, Fout2 = 2, 300, 20, 33
    k_x, k_adj, k_w, k_b, key = jax.random.split(key, 5)
    stdv2 = 1.0 / math.sqrt(Fout2)
    x2 = jax.random.normal(k_x, (B2, N2, Fin2), dtype=jnp.float32)
    adj2 = jax.random.uniform(k_adj, (B2, N2, N2), dtype=jnp.float32)
    weight2 = jax.random.uniform(k_w, (Fin2, Fout2), jnp.float32, minval=-stdv2, maxval=stdv2)
    bias2 = jax.random.uniform(k_b, (1, 1, Fout2), jnp.float32, minval=-stdv2, maxval=stdv2)
    out2 = graph_convolution(x2, adj2, weight2, bias=bias2)
    jax.block_until_ready(out2)
    assert out2.shape == (B2, N2, Fout2)
    assert jnp.allclose(out2, reference(x2, adj2, weight2, bias2), atol=1e-2, rtol=1e-3)

    print("KERNEL_OK")
</pallas_src>

<mosaic_0001>
module attributes {stable_mosaic.version = 11 : i64} {
  func.func @_gcn_kernel_inplace(%arg0: i32, %arg1: i32, %arg2: i32, %arg3: memref<1x128x128xf32, #tpu.memory_space<vmem>>, %arg4: memref<1x128x128xf32, #tpu.memory_space<vmem>>, %arg5: memref<128x128xf32, #tpu.memory_space<vmem>>, %arg6: memref<1x128xf32, #tpu.memory_space<vmem>>, %arg7: memref<1x128x128xf32, #tpu.memory_space<vmem>>, %arg8: memref<128x128xf32, #tpu.memory_space<vmem>>) attributes {dimension_semantics = [#tpu.dimension_semantics<parallel>, #tpu.dimension_semantics<arbitrary>, #tpu.dimension_semantics<arbitrary>], iteration_bounds = array<i64: 2, 1, 1>, scalar_prefetch = 0 : i64, scratch_operands = 1 : i64, tpu.core_type = #tpu.core_type<tc>, window_params = [{transform_indices = @transform_0, window_bounds = array<i64: 1, 128, 128>}, {transform_indices = @transform_1, window_bounds = array<i64: 1, 128, 128>}, {pipeline_mode = #tpu.pipeline_mode<synchronous>, transform_indices = @transform_2, window_bounds = array<i64: 128, 128>}, {pipeline_mode = #tpu.pipeline_mode<synchronous>, transform_indices = @transform_3, window_bounds = array<i64: 1, 128>}, {transform_indices = @transform_4, window_bounds = array<i64: 1, 128, 128>}]} {
    %c128_i32 = arith.constant 128 : i32
    %0 = arith.muli %arg2, %c128_i32 : i32
    %1 = tpu.assume_multiple %0, 128 : i32
    %c0_i32 = arith.constant 0 : i32
    %2 = arith.cmpi eq, %arg1, %c0_i32 : i32
    %3 = arith.extui %2 : i1 to i32
    %c0_i32_0 = arith.constant 0 : i32
    %4 = arith.cmpi ne, %3, %c0_i32_0 : i32
    scf.if %4 {
      %c0_9 = arith.constant 0 : index
      %c0_10 = arith.constant 0 : index
      %c0_11 = arith.constant 0 : index
      %16 = vector.load %arg3[%c0_9, %c0_10, %c0_11] : memref<1x128x128xf32, #tpu.memory_space<vmem>>, vector<1x128x128xf32>
      %17 = vector.shape_cast %16 : vector<1x128x128xf32> to vector<128x128xf32>
      %c0_12 = arith.constant 0 : index
      %c0_13 = arith.constant 0 : index
      %18 = vector.load %arg5[%c0_12, %c0_13] : memref<128x128xf32, #tpu.memory_space<vmem>>, vector<128x128xf32>
      %cst_14 = arith.constant dense<0.000000e+00> : vector<128x128xf32>
      %19 = tpu.matmul %17, %18, %cst_14 {dimension_numbers = #tpu.dot_dimension_numbers<[1], [0], [0], [1], [0, 0, 1, 1], [], []>} : vector<128x128xf32>, vector<128x128xf32>, vector<128x128xf32> -> vector<128x128xf32>
      %20 = arith.index_cast %1 : i32 to index
      %c0_15 = arith.constant 0 : index
      %21 = vector.load %arg8[%20, %c0_15] : memref<128x128xf32, #tpu.memory_space<vmem>>, vector<128x128xf32>
      tpu.vector_store %arg8[%20, %c0_15], %19 {strides = array<i32>} : memref<128x128xf32, #tpu.memory_space<vmem>>, vector<128x128xf32>,
    } else {
    }
    %c0 = arith.constant 0 : index
    %c0_1 = arith.constant 0 : index
    %c0_2 = arith.constant 0 : index
    %5 = vector.load %arg4[%c0, %c0_1, %c0_2] : memref<1x128x128xf32, #tpu.memory_space<vmem>>, vector<1x128x128xf32>
    %6 = vector.shape_cast %5 : vector<1x128x128xf32> to vector<128x128xf32>
    %7 = arith.index_cast %1 : i32 to index
    %c0_3 = arith.constant 0 : index
    %8 = vector.load %arg8[%7, %c0_3] : memref<128x128xf32, #tpu.memory_space<vmem>>, vector<128x128xf32>
    %cst = arith.constant dense<0.000000e+00> : vector<128x128xf32>
    %9 = tpu.matmul %6, %8, %cst {dimension_numbers = #tpu.dot_dimension_numbers<[1], [0], [0], [1], [0, 0, 1, 1], [], []>} : vector<128x128xf32>, vector<128x128xf32>, vector<128x128xf32> -> vector<128x128xf32>
    %c0_4 = arith.constant 0 : index
    %c0_5 = arith.constant 0 : index
    %10 = vector.load %arg6[%c0_4, %c0_5] : memref<1x128xf32, #tpu.memory_space<vmem>>, vector<1x128xf32>
    %11 = vector.broadcast %10 : vector<1x128xf32> to vector<128x128xf32>
    %12 = arith.addf %9, %11 : vector<128x128xf32>
    %c0_6 = arith.constant 0 : index
    %c0_7 = arith.constant 0 : index
    %c0_8 = arith.constant 0 : index
    %13 = vector.load %arg7[%c0_6, %c0_7, %c0_8] : memref<1x128x128xf32, #tpu.memory_space<vmem>>, vector<1x128x128xf32>
    %14 = vector.shape_cast %13 : vector<1x128x128xf32> to vector<128x128xf32>
    %15 = vector.shape_cast %12 : vector<128x128xf32> to vector<1x128x128xf32>
    tpu.vector_store %arg7[%c0_6, %c0_7, %c0_8], %15 {strides = array<i32>} : memref<1x128x128xf32, #tpu.memory_space<vmem>>, vector<1x128x128xf32>,
    return
  }
  func.func @transform_0(%arg0: i32, %arg1: i32, %arg2: i32) -> (i32, i32, i32) {
    %c1_i32 = arith.constant 1 : i32
    %0 = arith.subi %c1_i32, %arg1 : i32
    %c0_i32 = arith.constant 0 : i32
    %1 = arith.maxsi %0, %c0_i32 : i32
    %2 = arith.muli %arg2, %1 : i32
    %c0_i32_0 = arith.constant 0 : i32
    %c0_i32_1 = arith.constant 0 : i32
    return %arg0, %2, %c0_i32_0 : i32, i32, i32
  }
  func.func @transform_1(%arg0: i32, %arg1: i32, %arg2: i32) -> (i32, i32, i32) {
    %c0_i32 = arith.constant 0 : i32
    return %arg0, %arg1, %arg2 : i32, i32, i32
  }
  func.func @transform_2(%arg0: i32, %arg1: i32, %arg2: i32) -> (i32, i32) {
    %c0_i32 = arith.constant 0 : i32
    %c0_i32_0 = arith.constant 0 : i32
    %c0_i32_1 = arith.constant 0 : i32
    return %c0_i32, %c0_i32_0 : i32, i32
  }
  func.func @transform_3(%arg0: i32, %arg1: i32, %arg2: i32) -> (i32, i32) {
    %c0_i32 = arith.constant 0 : i32
    %c0_i32_0 = arith.constant 0 : i32
    %c0_i32_1 = arith.constant 0 : i32
    return %c0_i32, %c0_i32_0 : i32, i32
  }
  func.func @transform_4(%arg0: i32, %arg1: i32, %arg2: i32) -> (i32, i32, i32) {
    %c0_i32 = arith.constant 0 : i32
    %c0_i32_0 = arith.constant 0 : i32
    return %arg0, %arg1, %c0_i32 : i32, i32, i32
  }
}

module attributes {stable_mosaic.version = 11 : i64} {
  func.func @_gcn_kernel_inplace(%arg0: i32, %arg1: i32, %arg2: i32, %arg3: memref<1x128x128xf32, #tpu.memory_space<vmem>>, %arg4: memref<1x128x128xf32, #tpu.memory_space<vmem>>, %arg5: memref<128x128xf32, #tpu.memory_space<vmem>>, %arg6: memref<1x128xf32, #tpu.memory_space<vmem>>, %arg7: memref<1x128x128xf32, #tpu.memory_space<vmem>>, %arg8: memref<128x128xf32, #tpu.memory_space<vmem>>) attributes {dimension_semantics = [#tpu.dimension_semantics<parallel>, #tpu.dimension_semantics<arbitrary>, #tpu.dimension_semantics<arbitrary>], iteration_bounds = array<i64: 2, 1, 1>, scalar_prefetch = 0 : i64, scratch_operands = 1 : i64, tpu.core_type = #tpu.core_type<tc>, window_params = [{transform_indices = @transform_0, window_bounds = array<i64: 1, 128, 128>}, {transform_indices = @transform_1, window_bounds = array<i64: 1, 128, 128>}, {pipeline_mode = #tpu.pipeline_mode<synchronous>, transform_indices = @transform_2, window_bounds = array<i64: 128, 128>}, {pipeline_mode = #tpu.pipeline_mode<synchronous>, transform_indices = @transform_3, window_bounds = array<i64: 1, 128>}, {transform_indices = @transform_4, window_bounds = array<i64: 1, 128, 128>}]} {
    %c128_i32 = arith.constant 128 : i32
    %0 = arith.muli %arg2, %c128_i32 : i32
    %1 = tpu.assume_multiple %0, 128 : i32
    %c0_i32 = arith.constant 0 : i32
    %2 = arith.cmpi eq, %arg1, %c0_i32 : i32
    %3 = arith.extui %2 : i1 to i32
    %c0_i32_0 = arith.constant 0 : i32
    %4 = arith.cmpi ne, %3, %c0_i32_0 : i32
    scf.if %4 {
      %c0_9 = arith.constant 0 : index
      %c0_10 = arith.constant 0 : index
      %c0_11 = arith.constant 0 : index
      %16 = vector.load %arg3[%c0_9, %c0_10, %c0_11] : memref<1x128x128xf32, #tpu.memory_space<vmem>>, vector<1x128x128xf32>
      %17 = vector.shape_cast %16 : vector<1x128x128xf32> to vector<128x128xf32>
      %c0_12 = arith.constant 0 : index
      %c0_13 = arith.constant 0 : index
      %18 = vector.load %arg5[%c0_12, %c0_13] : memref<128x128xf32, #tpu.memory_space<vmem>>, vector<128x128xf32>
      %cst_14 = arith.constant dense<0.000000e+00> : vector<128x128xf32>
      %19 = tpu.matmul %17, %18, %cst_14 {dimension_numbers = #tpu.dot_dimension_numbers<[1], [0], [0], [1], [0, 0, 1, 1], [], []>} : vector<128x128xf32>, vector<128x128xf32>, vector<128x128xf32> -> vector<128x128xf32>
      %20 = arith.index_cast %1 : i32 to index
      %c0_15 = arith.constant 0 : index
      %21 = vector.load %arg8[%20, %c0_15] : memref<128x128xf32, #tpu.memory_space<vmem>>, vector<128x128xf32>
      tpu.vector_store %arg8[%20, %c0_15], %19 {strides = array<i32>} : memref<128x128xf32, #tpu.memory_space<vmem>>, vector<128x128xf32>,
    } else {
    }
    %c0 = arith.constant 0 : index
    %c0_1 = arith.constant 0 : index
    %c0_2 = arith.constant 0 : index
    %5 = vector.load %arg4[%c0, %c0_1, %c0_2] : memref<1x128x128xf32, #tpu.memory_space<vmem>>, vector<1x128x128xf32>
    %6 = vector.shape_cast %5 : vector<1x128x128xf32> to vector<128x128xf32>
    %7 = arith.index_cast %1 : i32 to index
    %c0_3 = arith.constant 0 : index
    %8 = vector.load %arg8[%7, %c0_3] : memref<128x128xf32, #tpu.memory_space<vmem>>, vector<128x128xf32>
    %cst = arith.constant dense<0.000000e+00> : vector<128x128xf32>
    %9 = tpu.matmul %6, %8, %cst {dimension_numbers = #tpu.dot_dimension_numbers<[1], [0], [0], [1], [0, 0, 1, 1], [], []>} : vector<128x128xf32>, vector<128x128xf32>, vector<128x128xf32> -> vector<128x128xf32>
    %c0_4 = arith.constant 0 : index
    %c0_5 = arith.constant 0 : index
    %10 = vector.load %arg6[%c0_4, %c0_5] : memref<1x128xf32, #tpu.memory_space<vmem>>, vector<1x128xf32>
    %11 = vector.broadcast %10 : vector<1x128xf32> to vector<128x128xf32>
    %12 = arith.addf %9, %11 : vector<128x128xf32>
    %c0_6 = arith.constant 0 : index
    %c0_7 = arith.constant 0 : index
    %c0_8 = arith.constant 0 : index
    %13 = vector.load %arg7[%c0_6, %c0_7, %c0_8] : memref<1x128x128xf32, #tpu.memory_space<vmem>>, vector<1x128x128xf32>
    %14 = vector.shape_cast %13 : vector<1x128x128xf32> to vector<128x128xf32>
    %15 = vector.shape_cast %12 : vector<128x128xf32> to vector<1x128x128xf32>
    tpu.vector_store %arg7[%c0_6, %c0_7, %c0_8], %15 {strides = array<i32>} : memref<1x128x128xf32, #tpu.memory_space<vmem>>, vector<1x128x128xf32>,
    return
  }
  func.func @transform_0(%arg0: i32, %arg1: i32, %arg2: i32) -> (i32, i32, i32) {
    %c1_i32 = arith.constant 1 : i32
    %0 = arith.subi %c1_i32, %arg1 : i32
    %c0_i32 = arith.constant 0 : i32
    %1 = arith.maxsi %0, %c0_i32 : i32
    %2 = arith.muli %arg2, %1 : i32
    %c0_i32_0 = arith.constant 0 : i32
    %c0_i32_1 = arith.constant 0 : i32
    return %arg0, %2, %c0_i32_0 : i32, i32, i32
  }
  func.func @transform_1(%arg0: i32, %arg1: i32, %arg2: i32) -> (i32, i32, i32) {
    %c0_i32 = arith.constant 0 : i32
    return %arg0, %arg1, %arg2 : i32, i32, i32
  }
  func.func @transform_2(%arg0: i32, %arg1: i32, %arg2: i32) -> (i32, i32) {
    %c0_i32 = arith.constant 0 : i32
    %c0_i32_0 = arith.constant 0 : i32
    %c0_i32_1 = arith.constant 0 : i32
    return %c0_i32, %c0_i32_0 : i32, i32
  }
  func.func @transform_3(%arg0: i32, %arg1: i32, %arg2: i32) -> (i32, i32) {
    %c0_i32 = arith.constant 0 : i32
    %c0_i32_0 = arith.constant 0 : i32
    %c0_i32_1 = arith.constant 0 : i32
    return %c0_i32, %c0_i32_0 : i32, i32
  }
  func.func @transform_4(%arg0: i32, %arg1: i32, %arg2: i32) -> (i32, i32, i32) {
    %c0_i32 = arith.constant 0 : i32
    %c0_i32_0 = arith.constant 0 : i32
    return %arg0, %arg1, %c0_i32 : i32, i32, i32
  }
}

</mosaic_0001>

<llo_original>
// kernel: tpu_custom_call.1
$region0: #{tpu_custom_call.1}
  #allocation0 [shape = 'u32[]', space=smem, size = 0x4, offset = 0x4, fixed_abs, tag = 'smem constant byte address 0x4 - core index']
  #allocation1 [shape = 'u32[144,128]{1,0:T(1,128)}', space=vmem, size = 0x12000, scoped, tag = 'internal scratch']
  #allocation2 [shape = 'f32[128,128]{1,0:T(8,128)}', space=vmem, size = 0x10000, scoped, tag = 'scratch operand']
  %s0 = inlined_call_operand.hbm [shape: f32[2,128,128], index: 0, kind: input, shape index: {}]
  %s1 = inlined_call_operand.hbm [shape: f32[2,128,128], index: 1, kind: input, shape index: {}]
  %s2 = inlined_call_operand.hbm [shape: f32[128,128], index: 2, kind: input, shape index: {}]
  %s3 = inlined_call_operand.vmem [shape: f32[1,128], index: 3, kind: input, shape index: {}]
  %s4 = inlined_call_operand.hbm [shape: f32[2,128,128], index: 4, kind: output, shape index: {}]
  %s5 = sld [smem:[#allocation0]]
  $region65: #{tpu_custom_call.1} parent=0
    _
  %s7 = ssub.s32 1, %s5
  %s8 = scalar_select 0, %s7, %s5
  $region1: #{tpu_custom_call.1} parent=0
    #allocation3 [shape = 'u8[131072]{0}', space=vmem, size = 0x20000, scoped, tag = 'input window, operand 0']
    #allocation4 [shape = 's32[2]{0}', space=sflag, size = 0x8, scoped, tag = 'scoped memory for tpu_custom_call.1']
    #allocation5 [shape = 's32[2]{0}', space=sflag, size = 0x8, scoped, tag = 'scoped memory for tpu_custom_call.1']
    #allocation6 [shape = 'u8[131072]{0}', space=vmem, size = 0x20000, scoped, tag = 'input window, operand 1']
    #allocation7 [shape = 's32[2]{0}', space=sflag, size = 0x8, scoped, tag = 'scoped memory for tpu_custom_call.1']
    #allocation8 [shape = 'u8[65536]{0}', space=vmem, size = 0x10000, scoped, tag = 'input window, operand 2, single buffered']
    #allocation9 [shape = 'u8[131072]{0}', space=vmem, size = 0x20000, scoped, tag = 'output window, operand 0']
    %9 = vsyncpa [#allocation4], 0
    %s10 = scalar_lea.sflag [#allocation4], 1
    %11 = vsyncpa %s10, 0
    %12 = vsyncpa [#allocation7], 0
    %s13 = scalar_lea.sflag [#allocation7], 1
    %14 = vsyncpa %s13, 0
    %15 = vsyncpa [#allocation5], 0
    %s16 = scalar_lea.sflag [#allocation5], 1
    %17 = vsyncpa %s16, 0
    loop: start=0, step=1, limit=4
    $region2: #{tpu_custom_call.1} parent=1 // loop_pre_header
      _
    $region3: #{tpu_custom_call.1} parent=1 // loop_header
      %s19 = sphi 0, %s23
      %p20 = scmp.ge.s32.totalorder %s19, 4
      %s26 = sphi 0, %s45
      %s27 = sphi 0, %s41
      %s28 = sphi 0, %s37
      %s29 = sphi 0, %s26
      %s30 = sphi 0, %s27
      %s31 = sphi 0, %s28
      %s32 = sphi 0, %s29
      %s33 = sphi 0, %s30
      %s34 = sphi 0, %s31
      %s58 = sphi 0, %s60
      %s61 = sphi 0, %s58
      %s62 = sphi 0, %s61
      %s78 = sphi 0, %s62
      %s88 = sphi 0, %s90
      %s91 = sphi 0, %s88
      %s92 = sphi 0, %s91
      %s108 = sphi 0, %s92
      %s112 = sphi 0, %s112
      %s114 = sphi 0, %s112
      %s115 = sphi 0, %s114
      %s129 = sphi 0, %s115
      %s133 = sphi 0, %s133
      %s135 = sphi 0, %s133
      %s136 = sphi 0, %s135
      %s150 = sphi 0, %s136
      %s158 = sphi 0, %s160
      %s161 = sphi 0, %s158
      %s162 = sphi 0, %s161
      %s178 = sphi 0, %s162
    $region4: #{tpu_custom_call.1} parent=1 // loop_header_branch
      %22 = sbr.rel (%p20) target = $region8
    $region5: #{tpu_custom_call.1} parent=1 // loop_body
      %s24 = ssub.s32 %s19, 1
      %s25 = ssub.s32 %s19, 2
      %s35 = sadd.s32 1, %s28
      %p36 = scmp.ge.s32.totalorder %s35, 1
      %s37 = scalar_select %p36, 0, %s35
      %s38 = sadd.s32 1, %s27
      %s39 = scalar_select %p36, %s38, %s27
      %p40 = scmp.ge.s32.totalorder %s39, 1
      %s41 = scalar_select %p40, 0, %s39
      %s42 = sadd.s32 1, %s26
      %s43 = scalar_select %p40, %s42, %s26
      %p44 = scmp.ge.s32.totalorder %s43, 2
      %s45 = scalar_select %p44, 0, %s43
      %s46 = ssub.s32 1, %s27
      %p47 = scmp.gt.s32.totalorder %s46, 0
      %s48 = scalar_select %p47, %s46, 0
      %s49 = smul.u32 %s28, %s48
      %s50 = ssub.s32 1, %s41
      %p51 = scmp.gt.s32.totalorder %s50, 0
      %s52 = scalar_select %p51, %s50, 0
      %s53 = smul.u32 %s37, %s52
      %s54 = ssub.s32 %s26, %s45
      %s55 = ssub.s32 %s49, %s53
      %s56 = sor.u32 %s54, %s55
      %p57 = scmp.eq.s32.totalorder %s56, 0
      %s59 = sadd.s32 %s58, 1
      %s60 = scalar_select %p57, %s58, %s59
      %p63 = pneg %p57
      %p64 = scmp.eq.s32.totalorder %s19, 1
      %p65 = por %p63, %p64
      %p66 = scmp.ne.s32.totalorder %s58, %s61
      %p67 = scmp.eq.s32.totalorder %s19, 0
      %p68 = por %p66, %p67
      %p69 = scmp.ne.s32.totalorder %s58, %s61
      %p70 = scmp.eq.s32.totalorder %s24, 1
      %p71 = por %p69, %p70
      %p72 = scmp.ne.s32.totalorder %s61, %s62
      %p73 = scmp.eq.s32.totalorder %s24, 0
      %p74 = por %p72, %p73
      %p75 = scmp.ne.s32.totalorder %s61, %s62
      %p76 = scmp.eq.s32.totalorder %s25, 1
      %p77 = por %p75, %p76
      %p79 = scmp.ne.s32.totalorder %s62, %s78
      %p80 = scmp.eq.s32.totalorder %s25, 0
      %p81 = por %p79, %p80
      %s82 = ssub.s32 %s26, %s45
      %s83 = ssub.s32 %s27, %s41
      %s84 = sor.u32 %s82, %s83
      %s85 = ssub.s32 %s28, %s37
      %s86 = sor.u32 %s84, %s85
      %p87 = scmp.eq.s32.totalorder %s86, 0
      %s89 = sadd.s32 %s88, 1
      %s90 = scalar_select %p87, %s88, %s89
      %p93 = pneg %p87
      %p94 = scmp.eq.s32.totalorder %s19, 1
      %p95 = por %p93, %p94
      %p96 = scmp.ne.s32.totalorder %s88, %s91
      %p97 = scmp.eq.s32.totalorder %s19, 0
      %p98 = por %p96, %p97
      %p99 = scmp.ne.s32.totalorder %s88, %s91
      %p100 = scmp.eq.s32.totalorder %s24, 1
      %p101 = por %p99, %p100
      %p102 = scmp.ne.s32.totalorder %s91, %s92
      %p103 = scmp.eq.s32.totalorder %s24, 0
      %p104 = por %p102, %p103
      %p105 = scmp.ne.s32.totalorder %s91, %s92
      %p106 = scmp.eq.s32.totalorder %s25, 1
      %p107 = por %p105, %p106
      %p109 = scmp.ne.s32.totalorder %s92, %s108
      %p110 = scmp.eq.s32.totalorder %s25, 0
      %p111 = por %p109, %p110
      %s113 = sadd.s32 %s112, 1
      %p116 = scmp.eq.s32.totalorder %s19, 1
      %p117 = scmp.ne.s32.totalorder %s112, %s114
      %p118 = scmp.eq.s32.totalorder %s19, 0
      %p119 = por %p117, %p118
      %p120 = scmp.ne.s32.totalorder %s112, %s114
      %p121 = scmp.eq.s32.totalorder %s24, 1
      %p122 = por %p120, %p121
      %p123 = scmp.ne.s32.totalorder %s114, %s115
      %p124 = scmp.eq.s32.totalorder %s24, 0
      %p125 = por %p123, %p124
      %p126 = scmp.ne.s32.totalorder %s114, %s115
      %p127 = scmp.eq.s32.totalorder %s25, 1
      %p128 = por %p126, %p127
      %p130 = scmp.ne.s32.totalorder %s115, %s129
      %p131 = scmp.eq.s32.totalorder %s25, 0
      %p132 = por %p130, %p131
      %s134 = sadd.s32 %s133, 1
      %p137 = scmp.eq.s32.totalorder %s19, 1
      %p138 = scmp.ne.s32.totalorder %s133, %s135
      %p139 = scmp.eq.s32.totalorder %s19, 0
      %p140 = por %p138, %p139
      %p141 = scmp.ne.s32.totalorder %s133, %s135
      %p142 = scmp.eq.s32.totalorder %s24, 1
      %p143 = por %p141, %p142
      %p144 = scmp.ne.s32.totalorder %s135, %s136
      %p145 = scmp.eq.s32.totalorder %s24, 0
      %p146 = por %p144, %p145
      %p147 = scmp.ne.s32.totalorder %s135, %s136
      %p148 = scmp.eq.s32.totalorder %s25, 1
      %p149 = por %p147, %p148
      %p151 = scmp.ne.s32.totalorder %s136, %s150
      %p152 = scmp.eq.s32.totalorder %s25, 0
      %p153 = por %p151, %p152
      %s154 = ssub.s32 %s26, %s45
      %s155 = ssub.s32 %s27, %s41
      %s156 = sor.u32 %s154, %s155
      %p157 = scmp.eq.s32.totalorder %s156, 0
      %s159 = sadd.s32 %s158, 1
      %s160 = scalar_select %p157, %s158, %s159
      %p163 = pneg %p157
      %p164 = scmp.eq.s32.totalorder %s19, 1
      %p165 = por %p163, %p164
      %p166 = scmp.ne.s32.totalorder %s158, %s161
      %p167 = scmp.eq.s32.totalorder %s19, 0
      %p168 = por %p166, %p167
      %p169 = scmp.ne.s32.totalorder %s158, %s161
      %p170 = scmp.eq.s32.totalorder %s24, 1
      %p171 = por %p169, %p170
      %p172 = scmp.ne.s32.totalorder %s161, %s162
      %p173 = scmp.eq.s32.totalorder %s24, 0
      %p174 = por %p172, %p173
      %p175 = scmp.ne.s32.totalorder %s161, %s162
      %p176 = scmp.eq.s32.totalorder %s25, 1
      %p177 = por %p175, %p176
      %p179 = scmp.ne.s32.totalorder %s162, %s178
      %p180 = scmp.eq.s32.totalorder %s25, 0
      %p181 = por %p179, %p180
      %p182 = scmp.le.s32.totalorder 1, %s19
      %p183 = scmp.lt.s32.totalorder %s19, 3
      %p184 = pnand %p182, %p183
      %p185 = pneg %p184
      // Predicated region
      $region9: #{tpu_custom_call.1} parent=5 // pred_check
        _
      $region10: #{tpu_custom_call.1} parent=5 // pred_check_branch
        %187 = sbr.rel (%p184) target = $region12
      $region11: #{tpu_custom_call.1} parent=5 // pred_region
        %s188 = ssub.s32 %s19, 1
        // Predicated region
        $region13: #{tpu_custom_call.1} parent=11 // pred_check
          %p189 = pneg %p125
        $region14: #{tpu_custom_call.1} parent=11 // pred_check_branch
          %191 = sbr.rel (%p189) target = $region16
        $region15: #{tpu_custom_call.1} parent=11 // pred_region
          %s193 = ssub.s32 2048, 2048
          %194 = vsyncadd [#allocation7], %s193
          %s195 = sshll.u32 [#allocation8], 4
          %s196 = int_to_ptr.vmem [resolvable:$true] %s195
          %201 = dma.hbm_to_vmem [thread:$0]  %s2, 2048, %s196, [#allocation7], 128, 128, 8
        $region16: #{tpu_custom_call.1} parent=11 // pred_fallthru
          _
        // Predicated region
        $region17: #{tpu_custom_call.1} parent=11 // pred_check
          %p202 = pneg %p146
        $region18: #{tpu_custom_call.1} parent=11 // pred_check_branch
          %204 = sbr.rel (%p202) target = $region20
        $region19: #{tpu_custom_call.1} parent=11 // pred_region
          _
        $region20: #{tpu_custom_call.1} parent=11 // pred_fallthru
          _
      $region12: #{tpu_custom_call.1} parent=5 // pred_fallthru
        _
      %p205 = scmp.lt.s32.totalorder %s19, 2
      // Predicated region
      $region21: #{tpu_custom_call.1} parent=5 // pred_check
        %p206 = pneg %p205
      $region22: #{tpu_custom_call.1} parent=5 // pred_check_branch
        %208 = sbr.rel (%p206) target = $region24
      $region23: #{tpu_custom_call.1} parent=5 // pred_region
        // Predicated region
        $region25: #{tpu_custom_call.1} parent=23 // pred_check
          %p209 = pneg %p68
        $region26: #{tpu_custom_call.1} parent=23 // pred_check_branch
          %211 = sbr.rel (%p209) target = $region28
        $region27: #{tpu_custom_call.1} parent=23 // pred_region
          %s212 = sand.u32 %s58, 1
          %s213 = scalar_lea.sflag [#allocation4], %s212
          %s214 = sand.u32 %s58, 1
          %s215 = smul.addr %s214, 128
          %s216 = scalar_lea.vmem [#allocation3], %s215
          %s217 = ssub.s32 1, %s27
          %p218 = scmp.gt.s32.totalorder %s217, 0
          %s219 = scalar_select %p218, %s217, 0
          %s220 = smul.u32 %s28, %s219
          %s221 = smul.u32 16, %s220
          %s223 = ssub.s32 2048, 2048
          %224 = vsyncadd %s213, %s223
          %s225 = smul.addr %s26, 16
          %s226 = sadd.s32 %s221, %s225
          %s227 = smul.addr %s226, 128
          %s228 = scalar_lea.hbm %s0, %s227
          %s229 = sshll.u32 %s216, 4
          %s230 = int_to_ptr.vmem [resolvable:$true] %s229
          %235 = dma.hbm_to_vmem [thread:$0]  %s228, 2048, %s230, %s213, 128, 128, 8
        $region28: #{tpu_custom_call.1} parent=23 // pred_fallthru
          _
        // Predicated region
        $region29: #{tpu_custom_call.1} parent=23 // pred_check
          %p236 = pneg %p98
        $region30: #{tpu_custom_call.1} parent=23 // pred_check_branch
          %238 = sbr.rel (%p236) target = $region32
        $region31: #{tpu_custom_call.1} parent=23 // pred_region
          %s239 = sand.u32 %s19, 1
          %s240 = scalar_lea.sflag [#allocation7], %s239
          %s241 = sand.u32 %s88, 1
          %s242 = smul.addr %s241, 128
          %s243 = scalar_lea.vmem [#allocation6], %s242
          %s244 = smul.u32 16, %s27
          %s246 = ssub.s32 2048, 2048
          %247 = vsyncadd %s240, %s246
          %s248 = sadd.s32 %s28, %s244
          %s249 = smul.addr %s26, 16
          %s250 = sadd.s32 %s248, %s249
          %s251 = smul.addr %s250, 128
          %s252 = scalar_lea.hbm %s1, %s251
          %s253 = sshll.u32 %s243, 4
          %s254 = int_to_ptr.vmem [resolvable:$true] %s253
          %259 = dma.hbm_to_vmem [thread:$0]  %s252, 2048, %s254, %s240, 128, 128, 8
        $region32: #{tpu_custom_call.1} parent=23 // pred_fallthru
          _
      $region24: #{tpu_custom_call.1} parent=5 // pred_fallthru
        _
      %p260 = scmp.le.s32.totalorder 1, %s19
      %p261 = scmp.lt.s32.totalorder %s19, 3
      %p262 = pnand %p260, %p261
      %p263 = pneg %p262
      // Predicated region
      $region33: #{tpu_custom_call.1} parent=5 // pred_check
        _
      $region34: #{tpu_custom_call.1} parent=5 // pred_check_branch
        %265 = sbr.rel (%p262) target = $region36
      $region35: #{tpu_custom_call.1} parent=5 // pred_region
        %s266 = ssub.s32 %s19, 1
        %s267 = sand.u32 %s61, 1
        %s268 = scalar_lea.sflag [#allocation4], %s267
        %s269 = sand.u32 %s61, 1
        %s270 = smul.addr %s269, 128
        %s271 = scalar_lea.vmem [#allocation3], %s270
        // Predicated region
        $region37: #{tpu_custom_call.1} parent=35 // pred_check
          %p272 = pneg %p74
        $region38: #{tpu_custom_call.1} parent=35 // pred_check_branch
          %274 = sbr.rel (%p272) target = $region40
        $region39: #{tpu_custom_call.1} parent=35 // pred_region
          %275 = dma.done %s268, 2048
        $region40: #{tpu_custom_call.1} parent=35 // pred_fallthru
          _
        %s276 = sand.u32 %s24, 1
        %s277 = scalar_lea.sflag [#allocation7], %s276
        %s278 = sand.u32 %s91, 1
        %s279 = smul.addr %s278, 128
        %s280 = scalar_lea.vmem [#allocation6], %s279
        // Predicated region
        $region41: #{tpu_custom_call.1} parent=35 // pred_check
          %p281 = pneg %p104
        $region42: #{tpu_custom_call.1} parent=35 // pred_check_branch
          %283 = sbr.rel (%p281) target = $region44
        $region43: #{tpu_custom_call.1} parent=35 // pred_region
          %284 = dma.done %s277, 2048
        $region44: #{tpu_custom_call.1} parent=35 // pred_fallthru
          _
        // Predicated region
        $region45: #{tpu_custom_call.1} parent=35 // pred_check
          %p285 = pneg %p125
        $region46: #{tpu_custom_call.1} parent=35 // pred_check_branch
          %287 = sbr.rel (%p285) target = $region48
        $region47: #{tpu_custom_call.1} parent=35 // pred_region
          %288 = dma.done [#allocation7], 2048
        $region48: #{tpu_custom_call.1} parent=35 // pred_fallthru
          _
        %s289 = sand.u32 %s61, 1
        %s290 = scalar_lea.sflag [#allocation4], %s289
        %s291 = sand.u32 %s61, 1
        %s292 = smul.addr %s291, 128
        %s293 = scalar_lea.vmem [#allocation3], %s292
        %p294 = pneg %p74
        %p295 = pneg %p71
        %s296 = sand.u32 %s24, 1
        %s297 = scalar_lea.sflag [#allocation7], %s296
        %s298 = sand.u32 %s91, 1
        %s299 = smul.addr %s298, 128
        %s300 = scalar_lea.vmem [#allocation6], %s299
        %p301 = pneg %p104
        %p302 = pneg %p101
        %p303 = pneg %p125
        %p304 = pneg %p122
        %p305 = pneg %p146
        %p306 = pneg %p143
        %p307 = pneg %p174
        %p308 = pneg %p171
        %s309 = sand.u32 %s161, 1
        %s310 = scalar_lea.sflag [#allocation5], %s309
        %s311 = sand.u32 %s161, 1
        %s312 = smul.addr %s311, 128
        %s313 = scalar_lea.vmem [#allocation9], %s312
        %s314 = ssub.s32 1, %s30
        %p315 = scmp.gt.s32.totalorder %s314, 0
        %s316 = scalar_select %p315, %s314, 0
        %s317 = smul.u32 %s31, %s316
        %s318 = smul.u32 16, %s317
        %s319 = smul.u32 16, %s30
        %s320 = smul.u32 16, %s30
        %s321 = smul.u32 %s31, 128
        %p322 = scmp.eq.s32.totalorder %s30, 0
        // Predicated region
        $region49: #{tpu_custom_call.1} parent=35 // pred_check
          %p323 = pneg %p322
        $region50: #{tpu_custom_call.1} parent=35 // pred_check_branch
          %325 = sbr.rel (%p323) target = $region52
        $region51: #{tpu_custom_call.1} parent=35 // pred_region
          %v326 = vld [vmem:[%s271] sm:$0xff]
          %v327 = vld [vmem:[%s271 + $0x8] sm:$0xff]
          %v328 = vld [vmem:[%s271 + $0x10] sm:$0xff]
          %v329 = vld [vmem:[%s271 + $0x18] sm:$0xff]
          %v330 = vld [vmem:[%s271 + $0x20] sm:$0xff]
          %v331 = vld [vmem:[%s271 + $0x28] sm:$0xff]
          %v332 = vld [vmem:[%s271 + $0x30] sm:$0xff]
          %v333 = vld [vmem:[%s271 + $0x38] sm:$0xff]
          %v334 = vld [vmem:[%s271 + $0x40] sm:$0xff]
          %v335 = vld [vmem:[%s271 + $0x48] sm:$0xff]
          %v336 = vld [vmem:[%s271 + $0x50] sm:$0xff]
          %v337 = vld [vmem:[%s271 + $0x58] sm:$0xff]
          %v338 = vld [vmem:[%s271 + $0x60] sm:$0xff]
          %v339 = vld [vmem:[%s271 + $0x68] sm:$0xff]
          %v340 = vld [vmem:[%s271 + $0x70] sm:$0xff]
          %v341 = vld [vmem:[%s271 + $0x78] sm:$0xff]
          %v342 = vld [vmem:[#allocation8] sm:$0xff]
          %v343 = vld [vmem:[#allocation8 + $0x8] sm:$0xff]
          %v344 = vld [vmem:[#allocation8 + $0x10] sm:$0xff]
          %v345 = vld [vmem:[#allocation8 + $0x18] sm:$0xff]
          %v346 = vld [vmem:[#allocation8 + $0x20] sm:$0xff]
          %v347 = vld [vmem:[#allocation8 + $0x28] sm:$0xff]
          %v348 = vld [vmem:[#allocation8 + $0x30] sm:$0xff]
          %v349 = vld [vmem:[#allocation8 + $0x38] sm:$0xff]
          %v350 = vld [vmem:[#allocation8 + $0x40] sm:$0xff]
          %v351 = vld [vmem:[#allocation8 + $0x48] sm:$0xff]
          %v352 = vld [vmem:[#allocation8 + $0x50] sm:$0xff]
          %v353 = vld [vmem:[#allocation8 + $0x58] sm:$0xff]
          %v354 = vld [vmem:[#allocation8 + $0x60] sm:$0xff]
          %v355 = vld [vmem:[#allocation8 + $0x68] sm:$0xff]
          %v356 = vld [vmem:[#allocation8 + $0x70] sm:$0xff]
          %v357 = vld [vmem:[#allocation8 + $0x78] sm:$0xff]
          %358 = vmatprep.subr.mxu0 0.0
          %359 = vmatpush1.msra.mxu0 %v357
          %360 = vmatprep.subr.mxu0 0.0
          %361 = vmatpush1.msra.mxu0 %v356
          %362 = vmatprep.subr.mxu0 0.0
          %363 = vmatpush1.msra.mxu0 %v355
          %364 = vmatprep.subr.mxu0 0.0
          %365 = vmatpush1.msra.mxu0 %v354
          %366 = vmatprep.subr.mxu0 0.0
          %367 = vmatpush1.msra.mxu0 %v353
          %368 = vmatprep.subr.mxu0 0.0
          %369 = vmatpush1.msra.mxu0 %v352
          %370 = vmatprep.subr.mxu0 0.0
          %371 = vmatpush1.msra.mxu0 %v351
          %372 = vmatprep.subr.mxu0 0.0
          %373 = vmatpush1.msra.mxu0 %v350
          %374 = vmatprep.subr.mxu0 0.0
          %375 = vmatpush1.msra.mxu0 %v349
          %376 = vmatprep.subr.mxu0 0.0
          %377 = vmatpush1.msra.mxu0 %v348
          %378 = vmatprep.subr.mxu0 0.0
          %379 = vmatpush1.msra.mxu0 %v347
          %380 = vmatprep.subr.mxu0 0.0
          %381 = vmatpush1.msra.mxu0 %v346
          %382 = vmatprep.subr.mxu0 0.0
          %383 = vmatpush1.msra.mxu0 %v345
          %384 = vmatprep.subr.mxu0 0.0
          %385 = vmatpush1.msra.mxu0 %v344
          %386 = vmatprep.subr.mxu0 0.0
          %387 = vmatpush1.msra.mxu0 %v343
          %388 = vmatprep.subr.mxu0 0.0
          %389 = vmatpush1.msra.mxu0 %v342
          %390 = vmatprep.subr.mxu0 0.0
          %391 = vmatpush2.msra.mxu0 0.0
          %392 = vmatprep.subr.mxu0 0.0
          %393 = vmatpush2.msra.mxu0 0.0
          %394 = vmatprep.subr.mxu0 0.0
          %395 = vmatpush2.msra.mxu0 0.0
          %396 = vmatprep.subr.mxu0 0.0
          %397 = vmatpush2.msra.mxu0 0.0
          %398 = vmatprep.subr.mxu0 0.0
          %399 = vmatpush2.msra.mxu0 0.0
          %400 = vmatprep.subr.mxu0 0.0
          %401 = vmatpush2.msra.mxu0 0.0
          %402 = vmatprep.subr.mxu0 0.0
          %403 = vmatpush2.msra.mxu0 0.0
          %404 = vmatprep.subr.mxu0 0.0
          %405 = vmatpush2.msra.mxu0 0.0
          %406 = vmatprep.subr.mxu0 0.0
          %407 = vmatpush2.msra.mxu0 0.0
          %408 = vmatprep.subr.mxu0 0.0
          %409 = vmatpush2.msra.mxu0 0.0
          %410 = vmatprep.subr.mxu0 0.0
          %411 = vmatpush2.msra.mxu0 0.0
          %412 = vmatprep.subr.mxu0 0.0
          %413 = vmatpush2.msra.mxu0 0.0
          %414 = vmatprep.subr.mxu0 0.0
          %415 = vmatpush2.msra.mxu0 0.0
          %416 = vmatprep.subr.mxu0 0.0
          %417 = vmatpush2.msra.mxu0 0.0
          %418 = vmatprep.subr.mxu0 0.0
          %419 = vmatpush2.msra.mxu0 0.0
          %420 = vmatprep.subr.mxu0 0.0
          %421 = vmatpush2.msra.mxu0 0.0
          %422 = vmatprep.mubr.f32.mxu0 0.0
          %423 = vmatmul.mubr.f32.gmra.mxu0 %v326
          %v424 = vpop.f32.mrf.mxu0
          %v425 = vadd.f32 0.0, %v424
          %v426 = vpop.f32.mrf.mxu0
          %427 = vmatprep.mubr.f32.mxu0 0.0
          %428 = vmatmul.mubr.f32.gmra.mxu0 %v327
          %v429 = vpop.f32.mrf.mxu0
          %v430 = vadd.f32 0.0, %v429
          %v431 = vpop.f32.mrf.mxu0
          %432 = vmatprep.mubr.f32.mxu0 0.0
          %433 = vmatmul.mubr.f32.gmra.mxu0 %v328
          %v434 = vpop.f32.mrf.mxu0
          %v435 = vadd.f32 0.0, %v434
          %v436 = vpop.f32.mrf.mxu0
          %437 = vmatprep.mubr.f32.mxu0 0.0
          %438 = vmatmul.mubr.f32.gmra.mxu0 %v329
          %v439 = vpop.f32.mrf.mxu0
          %v440 = vadd.f32 0.0, %v439
          %v441 = vpop.f32.mrf.mxu0
          %442 = vmatprep.mubr.f32.mxu0 0.0
          %443 = vmatmul.mubr.f32.gmra.mxu0 %v330
          %v444 = vpop.f32.mrf.mxu0
          %v445 = vadd.f32 0.0, %v444
          %v446 = vpop.f32.mrf.mxu0
          %447 = vmatprep.mubr.f32.mxu0 0.0
          %448 = vmatmul.mubr.f32.gmra.mxu0 %v331
          %v449 = vpop.f32.mrf.mxu0
          %v450 = vadd.f32 0.0, %v449
          %v451 = vpop.f32.mrf.mxu0
          %452 = vmatprep.mubr.f32.mxu0 0.0
          %453 = vmatmul.mubr.f32.gmra.mxu0 %v332
          %v454 = vpop.f32.mrf.mxu0
          %v455 = vadd.f32 0.0, %v454
          %v456 = vpop.f32.mrf.mxu0
          %457 = vmatprep.mubr.f32.mxu0 0.0
          %458 = vmatmul.mubr.f32.gmra.mxu0 %v333
          %v459 = vpop.f32.mrf.mxu0
          %v460 = vadd.f32 0.0, %v459
          %v461 = vpop.f32.mrf.mxu0
          %462 = vmatprep.mubr.f32.mxu0 0.0
          %463 = vmatmul.mubr.f32.gmra.mxu0 %v334
          %v464 = vpop.f32.mrf.mxu0
          %v465 = vadd.f32 0.0, %v464
          %v466 = vpop.f32.mrf.mxu0
          %467 = vmatprep.mubr.f32.mxu0 0.0
          %468 = vmatmul.mubr.f32.gmra.mxu0 %v335
          %v469 = vpop.f32.mrf.mxu0
          %v470 = vadd.f32 0.0, %v469
          %v471 = vpop.f32.mrf.mxu0
          %472 = vmatprep.mubr.f32.mxu0 0.0
          %473 = vmatmul.mubr.f32.gmra.mxu0 %v336
          %v474 = vpop.f32.mrf.mxu0
          %v475 = vadd.f32 0.0, %v474
          %v476 = vpop.f32.mrf.mxu0
          %477 = vmatprep.mubr.f32.mxu0 0.0
          %478 = vmatmul.mubr.f32.gmra.mxu0 %v337
          %v479 = vpop.f32.mrf.mxu0
          %v480 = vadd.f32 0.0, %v479
          %v481 = vpop.f32.mrf.mxu0
          %482 = vmatprep.mubr.f32.mxu0 0.0
          %483 = vmatmul.mubr.f32.gmra.mxu0 %v338
          %v484 = vpop.f32.mrf.mxu0
          %v485 = vadd.f32 0.0, %v484
          %v486 = vpop.f32.mrf.mxu0
          %487 = vmatprep.mubr.f32.mxu0 0.0
          %488 = vmatmul.mubr.f32.gmra.mxu0 %v339
          %v489 = vpop.f32.mrf.mxu0
          %v490 = vadd.f32 0.0, %v489
          %v491 = vpop.f32.mrf.mxu0
          %492 = vmatprep.mubr.f32.mxu0 0.0
          %493 = vmatmul.mubr.f32.gmra.mxu0 %v340
          %v494 = vpop.f32.mrf.mxu0
          %v495 = vadd.f32 0.0, %v494
          %v496 = vpop.f32.mrf.mxu0
          %497 = vmatprep.mubr.f32.mxu0 0.0
          %498 = vmatmul.mubr.f32.gmra.mxu0 %v341
          %v499 = vpop.f32.mrf.mxu0
          %v500 = vadd.f32 0.0, %v499
          %v501 = vpop.f32.mrf.mxu0
          %502 = vdwg.mxu0
          %s503 = scalar_lea.vmem [#allocation2], %s321
          %504 = vst [vmem:[%s503] sm:$0xff] %v425
          %505 = vst [vmem:[%s503 + $0x8] sm:$0xff] %v430
          %506 = vst [vmem:[%s503 + $0x10] sm:$0xff] %v435
          %507 = vst [vmem:[%s503 + $0x18] sm:$0xff] %v440
          %508 = vst [vmem:[%s503 + $0x20] sm:$0xff] %v445
          %509 = vst [vmem:[%s503 + $0x28] sm:$0xff] %v450
          %510 = vst [vmem:[%s503 + $0x30] sm:$0xff] %v455
          %511 = vst [vmem:[%s503 + $0x38] sm:$0xff] %v460
          %512 = vst [vmem:[%s503 + $0x40] sm:$0xff] %v465
          %513 = vst [vmem:[%s503 + $0x48] sm:$0xff] %v470
          %514 = vst [vmem:[%s503 + $0x50] sm:$0xff] %v475
          %515 = vst [vmem:[%s503 + $0x58] sm:$0xff] %v480
          %516 = vst [vmem:[%s503 + $0x60] sm:$0xff] %v485
          %517 = vst [vmem:[%s503 + $0x68] sm:$0xff] %v490
          %518 = vst [vmem:[%s503 + $0x70] sm:$0xff] %v495
          %519 = vst [vmem:[%s503 + $0x78] sm:$0xff] %v500
        $region52: #{tpu_custom_call.1} parent=35 // pred_fallthru
          _
        %v520 = vld [vmem:[%s280] sm:$0xff]
        %v521 = vld [vmem:[%s280 + $0x8] sm:$0xff]
        %v522 = vld [vmem:[%s280 + $0x10] sm:$0xff]
        %v523 = vld [vmem:[%s280 + $0x18] sm:$0xff]
        %v524 = vld [vmem:[%s280 + $0x20] sm:$0xff]
        %v525 = vld [vmem:[%s280 + $0x28] sm:$0xff]
        %v526 = vld [vmem:[%s280 + $0x30] sm:$0xff]
        %v527 = vld [vmem:[%s280 + $0x38] sm:$0xff]
        %v528 = vld [vmem:[%s280 + $0x40] sm:$0xff]
        %v529 = vld [vmem:[%s280 + $0x48] sm:$0xff]
        %v530 = vld [vmem:[%s280 + $0x50] sm:$0xff]
        %v531 = vld [vmem:[%s280 + $0x58] sm:$0xff]
        %v532 = vld [vmem:[%s280 + $0x60] sm:$0xff]
        %v533 = vld [vmem:[%s280 + $0x68] sm:$0xff]
        %v534 = vld [vmem:[%s280 + $0x70] sm:$0xff]
        %v535 = vld [vmem:[%s280 + $0x78] sm:$0xff]
        %s536 = scalar_lea.vmem [#allocation2], %s321
        %v537 = vld [vmem:[%s536] sm:$0xff]
        %v538 = vld [vmem:[%s536 + $0x8] sm:$0xff]
        %v539 = vld [vmem:[%s536 + $0x10] sm:$0xff]
        %v540 = vld [vmem:[%s536 + $0x18] sm:$0xff]
        %v541 = vld [vmem:[%s536 + $0x20] sm:$0xff]
        %v542 = vld [vmem:[%s536 + $0x28] sm:$0xff]
        %v543 = vld [vmem:[%s536 + $0x30] sm:$0xff]
        %v544 = vld [vmem:[%s536 + $0x38] sm:$0xff]
        %v545 = vld [vmem:[%s536 + $0x40] sm:$0xff]
        %v546 = vld [vmem:[%s536 + $0x48] sm:$0xff]
        %v547 = vld [vmem:[%s536 + $0x50] sm:$0xff]
        %v548 = vld [vmem:[%s536 + $0x58] sm:$0xff]
        %v549 = vld [vmem:[%s536 + $0x60] sm:$0xff]
        %v550 = vld [vmem:[%s536 + $0x68] sm:$0xff]
        %v551 = vld [vmem:[%s536 + $0x70] sm:$0xff]
        %v552 = vld [vmem:[%s536 + $0x78] sm:$0xff]
        %v553 = vld [vmem:[%s3] sm:$0x1]
        %v555 = vlaneseq
        %v556 = vshrl.u32 %v555, 7
        %v557 = vsub.s32 0, %v556
        %v558 = vrot.slane %v553, %v557
        %560 = vmatprep.subr.mxu0 0.0
        %561 = vmatpush1.msra.mxu0 %v552
        %562 = vmatprep.subr.mxu0 0.0
        %563 = vmatpush1.msra.mxu0 %v551
        %564 = vmatprep.subr.mxu0 0.0
        %565 = vmatpush1.msra.mxu0 %v550
        %566 = vmatprep.subr.mxu0 0.0
        %567 = vmatpush1.msra.mxu0 %v549
        %568 = vmatprep.subr.mxu0 0.0
        %569 = vmatpush1.msra.mxu0 %v548
        %570 = vmatprep.subr.mxu0 0.0
        %571 = vmatpush1.msra.mxu0 %v547
        %572 = vmatprep.subr.mxu0 0.0
        %573 = vmatpush1.msra.mxu0 %v546
        %574 = vmatprep.subr.mxu0 0.0
        %575 = vmatpush1.msra.mxu0 %v545
        %576 = vmatprep.subr.mxu0 0.0
        %577 = vmatpush1.msra.mxu0 %v544
        %578 = vmatprep.subr.mxu0 0.0
        %579 = vmatpush1.msra.mxu0 %v543
        %580 = vmatprep.subr.mxu0 0.0
        %581 = vmatpush1.msra.mxu0 %v542
        %582 = vmatprep.subr.mxu0 0.0
        %583 = vmatpush1.msra.mxu0 %v541
        %584 = vmatprep.subr.mxu0 0.0
        %585 = vmatpush1.msra.mxu0 %v540
        %586 = vmatprep.subr.mxu0 0.0
        %587 = vmatpush1.msra.mxu0 %v539
        %588 = vmatprep.subr.mxu0 0.0
        %589 = vmatpush1.msra.mxu0 %v538
        %590 = vmatprep.subr.mxu0 0.0
        %591 = vmatpush1.msra.mxu0 %v537
        %592 = vmatprep.subr.mxu0 0.0
        %593 = vmatpush2.msra.mxu0 0.0
        %594 = vmatprep.subr.mxu0 0.0
        %595 = vmatpush2.msra.mxu0 0.0
        %596 = vmatprep.subr.mxu0 0.0
        %597 = vmatpush2.msra.mxu0 0.0
        %598 = vmatprep.subr.mxu0 0.0
        %599 = vmatpush2.msra.mxu0 0.0
        %600 = vmatprep.subr.mxu0 0.0
        %601 = vmatpush2.msra.mxu0 0.0
        %602 = vmatprep.subr.mxu0 0.0
        %603 = vmatpush2.msra.mxu0 0.0
        %604 = vmatprep.subr.mxu0 0.0
        %605 = vmatpush2.msra.mxu0 0.0
        %606 = vmatprep.subr.mxu0 0.0
        %607 = vmatpush2.msra.mxu0 0.0
        %608 = vmatprep.subr.mxu0 0.0
        %609 = vmatpush2.msra.mxu0 0.0
        %610 = vmatprep.subr.mxu0 0.0
        %611 = vmatpush2.msra.mxu0 0.0
        %612 = vmatprep.subr.mxu0 0.0
        %613 = vmatpush2.msra.mxu0 0.0
        %614 = vmatprep.subr.mxu0 0.0
        %615 = vmatpush2.msra.mxu0 0.0
        %616 = vmatprep.subr.mxu0 0.0
        %617 = vmatpush2.msra.mxu0 0.0
        %618 = vmatprep.subr.mxu0 0.0
        %619 = vmatpush2.msra.mxu0 0.0
        %620 = vmatprep.subr.mxu0 0.0
        %621 = vmatpush2.msra.mxu0 0.0
        %622 = vmatprep.subr.mxu0 0.0
        %623 = vmatpush2.msra.mxu0 0.0
        %624 = vmatprep.mubr.f32.mxu0 0.0
        %625 = vmatmul.mubr.f32.gmra.mxu0 %v520
        %v626 = vpop.f32.mrf.mxu0
        %v627 = vadd.f32 %v558, %v626
        %v628 = vpop.f32.mrf.mxu0
        %629 = vmatprep.mubr.f32.mxu0 0.0
        %630 = vmatmul.mubr.f32.gmra.mxu0 %v521
        %v631 = vpop.f32.mrf.mxu0
        %v632 = vadd.f32 %v558, %v631
        %v633 = vpop.f32.mrf.mxu0
        %634 = vmatprep.mubr.f32.mxu0 0.0
        %635 = vmatmul.mubr.f32.gmra.mxu0 %v522
        %v636 = vpop.f32.mrf.mxu0
        %v637 = vadd.f32 %v558, %v636
        %v638 = vpop.f32.mrf.mxu0
        %639 = vmatprep.mubr.f32.mxu0 0.0
        %640 = vmatmul.mubr.f32.gmra.mxu0 %v523
        %v641 = vpop.f32.mrf.mxu0
        %v642 = vadd.f32 %v558, %v641
        %v643 = vpop.f32.mrf.mxu0
        %644 = vmatprep.mubr.f32.mxu0 0.0
        %645 = vmatmul.mubr.f32.gmra.mxu0 %v524
        %v646 = vpop.f32.mrf.mxu0
        %v647 = vadd.f32 %v558, %v646
        %v648 = vpop.f32.mrf.mxu0
        %649 = vmatprep.mubr.f32.mxu0 0.0
        %650 = vmatmul.mubr.f32.gmra.mxu0 %v525
        %v651 = vpop.f32.mrf.mxu0
        %v652 = vadd.f32 %v558, %v651
        %v653 = vpop.f32.mrf.mxu0
        %654 = vmatprep.mubr.f32.mxu0 0.0
        %655 = vmatmul.mubr.f32.gmra.mxu0 %v526
        %v656 = vpop.f32.mrf.mxu0
        %v657 = vadd.f32 %v558, %v656
        %v658 = vpop.f32.mrf.mxu0
        %659 = vmatprep.mubr.f32.mxu0 0.0
        %660 = vmatmul.mubr.f32.gmra.mxu0 %v527
        %v661 = vpop.f32.mrf.mxu0
        %v662 = vadd.f32 %v558, %v661
        %v663 = vpop.f32.mrf.mxu0
        %664 = vmatprep.mubr.f32.mxu0 0.0
        %665 = vmatmul.mubr.f32.gmra.mxu0 %v528
        %v666 = vpop.f32.mrf.mxu0
        %v667 = vadd.f32 %v558, %v666
        %v668 = vpop.f32.mrf.mxu0
        %669 = vmatprep.mubr.f32.mxu0 0.0
        %670 = vmatmul.mubr.f32.gmra.mxu0 %v529
        %v671 = vpop.f32.mrf.mxu0
        %v672 = vadd.f32 %v558, %v671
        %v673 = vpop.f32.mrf.mxu0
        %674 = vmatprep.mubr.f32.mxu0 0.0
        %675 = vmatmul.mubr.f32.gmra.mxu0 %v530
        %v676 = vpop.f32.mrf.mxu0
        %v677 = vadd.f32 %v558, %v676
        %v678 = vpop.f32.mrf.mxu0
        %679 = vmatprep.mubr.f32.mxu0 0.0
        %680 = vmatmul.mubr.f32.gmra.mxu0 %v531
        %v681 = vpop.f32.mrf.mxu0
        %v682 = vadd.f32 %v558, %v681
        %v683 = vpop.f32.mrf.mxu0
        %684 = vmatprep.mubr.f32.mxu0 0.0
        %685 = vmatmul.mubr.f32.gmra.mxu0 %v532
        %v686 = vpop.f32.mrf.mxu0
        %v687 = vadd.f32 %v558, %v686
        %v688 = vpop.f32.mrf.mxu0
        %689 = vmatprep.mubr.f32.mxu0 0.0
        %690 = vmatmul.mubr.f32.gmra.mxu0 %v533
        %v691 = vpop.f32.mrf.mxu0
        %v692 = vadd.f32 %v558, %v691
        %v693 = vpop.f32.mrf.mxu0
        %694 = vmatprep.mubr.f32.mxu0 0.0
        %695 = vmatmul.mubr.f32.gmra.mxu0 %v534
        %v696 = vpop.f32.mrf.mxu0
        %v697 = vadd.f32 %v558, %v696
        %v698 = vpop.f32.mrf.mxu0
        %699 = vmatprep.mubr.f32.mxu0 0.0
        %700 = vmatmul.mubr.f32.gmra.mxu0 %v535
        %v701 = vpop.f32.mrf.mxu0
        %v702 = vadd.f32 %v558, %v701
        %v703 = vpop.f32.mrf.mxu0
        %704 = vdwg.mxu0
        %705 = vst [vmem:[%s313] sm:$0xff] %v627
        %706 = vst [vmem:[%s313 + $0x8] sm:$0xff] %v632
        %707 = vst [vmem:[%s313 + $0x10] sm:$0xff] %v637
        %708 = vst [vmem:[%s313 + $0x18] sm:$0xff] %v642
        %709 = vst [vmem:[%s313 + $0x20] sm:$0xff] %v647
        %710 = vst [vmem:[%s313 + $0x28] sm:$0xff] %v652
        %711 = vst [vmem:[%s313 + $0x30] sm:$0xff] %v657
        %712 = vst [vmem:[%s313 + $0x38] sm:$0xff] %v662
        %713 = vst [vmem:[%s313 + $0x40] sm:$0xff] %v667
        %714 = vst [vmem:[%s313 + $0x48] sm:$0xff] %v672
        %715 = vst [vmem:[%s313 + $0x50] sm:$0xff] %v677
        %716 = vst [vmem:[%s313 + $0x58] sm:$0xff] %v682
        %717 = vst [vmem:[%s313 + $0x60] sm:$0xff] %v687
        %718 = vst [vmem:[%s313 + $0x68] sm:$0xff] %v692
        %719 = vst [vmem:[%s313 + $0x70] sm:$0xff] %v697
        %720 = vst [vmem:[%s313 + $0x78] sm:$0xff] %v702
        %s721 = sand.u32 %s161, 1
        %s722 = scalar_lea.sflag [#allocation5], %s721
        %s723 = sand.u32 %s161, 1
        %s724 = smul.addr %s723, 128
        %s725 = scalar_lea.vmem [#allocation9], %s724
        // Predicated region
        $region53: #{tpu_custom_call.1} parent=35 // pred_check
          %p726 = pneg %p171
        $region54: #{tpu_custom_call.1} parent=35 // pred_check_branch
          %728 = sbr.rel (%p726) target = $region56
        $region55: #{tpu_custom_call.1} parent=35 // pred_region
          %s729 = smul.u32 16, %s30
          %s731 = ssub.s32 2048, 2048
          %732 = vsyncadd %s722, %s731
          %s733 = smul.addr %s29, 16
          %s734 = sadd.s32 %s729, %s733
          %s735 = smul.addr %s734, 128
          %s736 = scalar_lea.hbm %s4, %s735
          %s737 = sshll.u32 %s725, 4
          %s738 = int_to_ptr.vmem [resolvable:$true] %s737
          %743 = dma.vmem_to_hbm [thread:$0]  %s738, 2048, %s736, %s722, 128, 128, 8
        $region56: #{tpu_custom_call.1} parent=35 // pred_fallthru
          _
      $region36: #{tpu_custom_call.1} parent=5 // pred_fallthru
        _
      %p744 = scmp.le.s32.totalorder 2, %s19
      // Predicated region
      $region57: #{tpu_custom_call.1} parent=5 // pred_check
        %p745 = pneg %p744
      $region58: #{tpu_custom_call.1} parent=5 // pred_check_branch
        %747 = sbr.rel (%p745) target = $region60
      $region59: #{tpu_custom_call.1} parent=5 // pred_region
        %s748 = ssub.s32 %s19, 2
        // Predicated region
        $region61: #{tpu_custom_call.1} parent=59 // pred_check
          %p749 = pneg %p177
        $region62: #{tpu_custom_call.1} parent=59 // pred_check_branch
          %751 = sbr.rel (%p749) target = $region64
        $region63: #{tpu_custom_call.1} parent=59 // pred_region
          %s752 = sand.u32 %s162, 1
          %s753 = scalar_lea.sflag [#allocation5], %s752
          %s754 = sand.u32 %s162, 1
          %s755 = smul.addr %s754, 128
          %s756 = scalar_lea.vmem [#allocation9], %s755
          %757 = dma.done %s753, 2048
        $region64: #{tpu_custom_call.1} parent=59 // pred_fallthru
          _
      $region60: #{tpu_custom_call.1} parent=5 // pred_fallthru
        _
    $region6: #{tpu_custom_call.1} parent=1 // loop_footer
      %s23 = sadd.s32 1, %s19
    $region7: #{tpu_custom_call.1} parent=1 // loop_footer_branch
      %18 = sbr.rel target = $region3
    $region8: #{tpu_custom_call.1} parent=1 // loop_exit
      _
    %758 = vsyncpa [#allocation4], 1
    %s759 = scalar_lea.sflag [#allocation4], 1
    %760 = vsyncpa %s759, 1
    %761 = vsyncpa [#allocation7], 1
    %s762 = scalar_lea.sflag [#allocation7], 1
    %763 = vsyncpa %s762, 1
    %764 = vsyncpa [#allocation5], 1
    %s765 = scalar_lea.sflag [#allocation5], 1
    %766 = vsyncpa %s765, 1

// kernel: tpu_custom_call.1
$region0: #{tpu_custom_call.1}
  #allocation0 [shape = 'u32[]', space=smem, size = 0x4, offset = 0x4, fixed_abs, tag = 'smem constant byte address 0x4 - core index']
  #allocation1 [shape = 'u32[144,128]{1,0:T(1,128)}', space=vmem, size = 0x12000, scoped, tag = 'internal scratch']
  #allocation2 [shape = 'f32[128,128]{1,0:T(8,128)}', space=vmem, size = 0x10000, scoped, tag = 'scratch operand']
  %s0 = inlined_call_operand.hbm [shape: f32[2,128,128], index: 0, kind: input, shape index: {}]
  %s1 = inlined_call_operand.hbm [shape: f32[2,128,128], index: 1, kind: input, shape index: {}]
  %s2 = inlined_call_operand.hbm [shape: f32[128,128], index: 2, kind: input, shape index: {}]
  %s3 = inlined_call_operand.vmem [shape: f32[1,128], index: 3, kind: input, shape index: {}]
  %s4 = inlined_call_operand.hbm [shape: f32[2,128,128], index: 4, kind: output, shape index: {}]
  %s5 = sld [smem:[#allocation0]]
  $region65: #{tpu_custom_call.1} parent=0
    _
  %s7 = ssub.s32 1, %s5
  %s8 = scalar_select 0, %s7, %s5
  $region1: #{tpu_custom_call.1} parent=0
    #allocation3 [shape = 'u8[131072]{0}', space=vmem, size = 0x20000, scoped, tag = 'input window, operand 0']
    #allocation4 [shape = 's32[2]{0}', space=sflag, size = 0x8, scoped, tag = 'scoped memory for tpu_custom_call.1']
    #allocation5 [shape = 's32[2]{0}', space=sflag, size = 0x8, scoped, tag = 'scoped memory for tpu_custom_call.1']
    #allocation6 [shape = 'u8[131072]{0}', space=vmem, size = 0x20000, scoped, tag = 'input window, operand 1']
    #allocation7 [shape = 's32[2]{0}', space=sflag, size = 0x8, scoped, tag = 'scoped memory for tpu_custom_call.1']
    #allocation8 [shape = 'u8[65536]{0}', space=vmem, size = 0x10000, scoped, tag = 'input window, operand 2, single buffered']
    #allocation9 [shape = 'u8[131072]{0}', space=vmem, size = 0x20000, scoped, tag = 'output window, operand 0']
    %9 = vsyncpa [#allocation4], 0
    %s10 = scalar_lea.sflag [#allocation4], 1
    %11 = vsyncpa %s10, 0
    %12 = vsyncpa [#allocation7], 0
    %s13 = scalar_lea.sflag [#allocation7], 1
    %14 = vsyncpa %s13, 0
    %15 = vsyncpa [#allocation5], 0
    %s16 = scalar_lea.sflag [#allocation5], 1
    %17 = vsyncpa %s16, 0
    loop: start=0, step=1, limit=4
    $region2: #{tpu_custom_call.1} parent=1 // loop_pre_header
      _
    $region3: #{tpu_custom_call.1} parent=1 // loop_header
      %s19 = sphi 0, %s23
      %p20 = scmp.ge.s32.totalorder %s19, 4
      %s26 = sphi 0, %s45
      %s27 = sphi 0, %s41
      %s28 = sphi 0, %s37
      %s29 = sphi 0, %s26
      %s30 = sphi 0, %s27
      %s31 = sphi 0, %s28
      %s32 = sphi 0, %s29
      %s33 = sphi 0, %s30
      %s34 = sphi 0, %s31
      %s58 = sphi 0, %s60
      %s61 = sphi 0, %s58
      %s62 = sphi 0, %s61
      %s78 = sphi 0, %s62
      %s88 = sphi 0, %s90
      %s91 = sphi 0, %s88
      %s92 = sphi 0, %s91
      %s108 = sphi 0, %s92
      %s112 = sphi 0, %s112
      %s114 = sphi 0, %s112
      %s115 = sphi 0, %s114
      %s129 = sphi 0, %s115
      %s133 = sphi 0, %s133
      %s135 = sphi 0, %s133
      %s136 = sphi 0, %s135
      %s150 = sphi 0, %s136
      %s158 = sphi 0, %s160
      %s161 = sphi 0, %s158
      %s162 = sphi 0, %s161
      %s178 = sphi 0, %s162
    $region4: #{tpu_custom_call.1} parent=1 // loop_header_branch
      %22 = sbr.rel (%p20) target = $region8
    $region5: #{tpu_custom_call.1} parent=1 // loop_body
      %s24 = ssub.s32 %s19, 1
      %s25 = ssub.s32 %s19, 2
      %s35 = sadd.s32 1, %s28
      %p36 = scmp.ge.s32.totalorder %s35, 1
      %s37 = scalar_select %p36, 0, %s35
      %s38 = sadd.s32 1, %s27
      %s39 = scalar_select %p36, %s38, %s27
      %p40 = scmp.ge.s32.totalorder %s39, 1
      %s41 = scalar_select %p40, 0, %s39
      %s42 = sadd.s32 1, %s26
      %s43 = scalar_select %p40, %s42, %s26
      %p44 = scmp.ge.s32.totalorder %s43, 2
      %s45 = scalar_select %p44, 0, %s43
      %s46 = ssub.s32 1, %s27
      %p47 = scmp.gt.s32.totalorder %s46, 0
      %s48 = scalar_select %p47, %s46, 0
      %s49 = smul.u32 %s28, %s48
      %s50 = ssub.s32 1, %s41
      %p51 = scmp.gt.s32.totalorder %s50, 0
      %s52 = scalar_select %p51, %s50, 0
      %s53 = smul.u32 %s37, %s52
      %s54 = ssub.s32 %s26, %s45
      %s55 = ssub.s32 %s49, %s53
      %s56 = sor.u32 %s54, %s55
      %p57 = scmp.eq.s32.totalorder %s56, 0
      %s59 = sadd.s32 %s58, 1
      %s60 = scalar_select %p57, %s58, %s59
      %p63 = pneg %p57
      %p64 = scmp.eq.s32.totalorder %s19, 1
      %p65 = por %p63, %p64
      %p66 = scmp.ne.s32.totalorder %s58, %s61
      %p67 = scmp.eq.s32.totalorder %s19, 0
      %p68 = por %p66, %p67
      %p69 = scmp.ne.s32.totalorder %s58, %s61
      %p70 = scmp.eq.s32.totalorder %s24, 1
      %p71 = por %p69, %p70
      %p72 = scmp.ne.s32.totalorder %s61, %s62
      %p73 = scmp.eq.s32.totalorder %s24, 0
      %p74 = por %p72, %p73
      %p75 = scmp.ne.s32.totalorder %s61, %s62
      %p76 = scmp.eq.s32.totalorder %s25, 1
      %p77 = por %p75, %p76
      %p79 = scmp.ne.s32.totalorder %s62, %s78
      %p80 = scmp.eq.s32.totalorder %s25, 0
      %p81 = por %p79, %p80
      %s82 = ssub.s32 %s26, %s45
      %s83 = ssub.s32 %s27, %s41
      %s84 = sor.u32 %s82, %s83
      %s85 = ssub.s32 %s28, %s37
      %s86 = sor.u32 %s84, %s85
      %p87 = scmp.eq.s32.totalorder %s86, 0
      %s89 = sadd.s32 %s88, 1
      %s90 = scalar_select %p87, %s88, %s89
      %p93 = pneg %p87
      %p94 = scmp.eq.s32.totalorder %s19, 1
      %p95 = por %p93, %p94
      %p96 = scmp.ne.s32.totalorder %s88, %s91
      %p97 = scmp.eq.s32.totalorder %s19, 0
      %p98 = por %p96, %p97
      %p99 = scmp.ne.s32.totalorder %s88, %s91
      %p100 = scmp.eq.s32.totalorder %s24, 1
      %p101 = por %p99, %p100
      %p102 = scmp.ne.s32.totalorder %s91, %s92
      %p103 = scmp.eq.s32.totalorder %s24, 0
      %p104 = por %p102, %p103
      %p105 = scmp.ne.s32.totalorder %s91, %s92
      %p106 = scmp.eq.s32.totalorder %s25, 1
      %p107 = por %p105, %p106
      %p109 = scmp.ne.s32.totalorder %s92, %s108
      %p110 = scmp.eq.s32.totalorder %s25, 0
      %p111 = por %p109, %p110
      %s113 = sadd.s32 %s112, 1
      %p116 = scmp.eq.s32.totalorder %s19, 1
      %p117 = scmp.ne.s32.totalorder %s112, %s114
      %p118 = scmp.eq.s32.totalorder %s19, 0
      %p119 = por %p117, %p118
      %p120 = scmp.ne.s32.totalorder %s112, %s114
      %p121 = scmp.eq.s32.totalorder %s24, 1
      %p122 = por %p120, %p121
      %p123 = scmp.ne.s32.totalorder %s114, %s115
      %p124 = scmp.eq.s32.totalorder %s24, 0
      %p125 = por %p123, %p124
      %p126 = scmp.ne.s32.totalorder %s114, %s115
      %p127 = scmp.eq.s32.totalorder %s25, 1
      %p128 = por %p126, %p127
      %p130 = scmp.ne.s32.totalorder %s115, %s129
      %p131 = scmp.eq.s32.totalorder %s25, 0
      %p132 = por %p130, %p131
      %s134 = sadd.s32 %s133, 1
      %p137 = scmp.eq.s32.totalorder %s19, 1
      %p138 = scmp.ne.s32.totalorder %s133, %s135
      %p139 = scmp.eq.s32.totalorder %s19, 0
      %p140 = por %p138, %p139
      %p141 = scmp.ne.s32.totalorder %s133, %s135
      %p142 = scmp.eq.s32.totalorder %s24, 1
      %p143 = por %p141, %p142
      %p144 = scmp.ne.s32.totalorder %s135, %s136
      %p145 = scmp.eq.s32.totalorder %s24, 0
      %p146 = por %p144, %p145
      %p147 = scmp.ne.s32.totalorder %s135, %s136
      %p148 = scmp.eq.s32.totalorder %s25, 1
      %p149 = por %p147, %p148
      %p151 = scmp.ne.s32.totalorder %s136, %s150
      %p152 = scmp.eq.s32.totalorder %s25, 0
      %p153 = por %p151, %p152
      %s154 = ssub.s32 %s26, %s45
      %s155 = ssub.s32 %s27, %s41
      %s156 = sor.u32 %s154, %s155
      %p157 = scmp.eq.s32.totalorder %s156, 0
      %s159 = sadd.s32 %s158, 1
      %s160 = scalar_select %p157, %s158, %s159
      %p163 = pneg %p157
      %p164 = scmp.eq.s32.totalorder %s19, 1
      %p165 = por %p163, %p164
      %p166 = scmp.ne.s32.totalorder %s158, %s161
      %p167 = scmp.eq.s32.totalorder %s19, 0
      %p168 = por %p166, %p167
      %p169 = scmp.ne.s32.totalorder %s158, %s161
      %p170 = scmp.eq.s32.totalorder %s24, 1
      %p171 = por %p169, %p170
      %p172 = scmp.ne.s32.totalorder %s161, %s162
      %p173 = scmp.eq.s32.totalorder %s24, 0
      %p174 = por %p172, %p173
      %p175 = scmp.ne.s32.totalorder %s161, %s162
      %p176 = scmp.eq.s32.totalorder %s25, 1
      %p177 = por %p175, %p176
      %p179 = scmp.ne.s32.totalorder %s162, %s178
      %p180 = scmp.eq.s32.totalorder %s25, 0
      %p181 = por %p179, %p180
      %p182 = scmp.le.s32.totalorder 1, %s19
      %p183 = scmp.lt.s32.totalorder %s19, 3
      %p184 = pnand %p182, %p183
      %p185 = pneg %p184
      // Predicated region
      $region9: #{tpu_custom_call.1} parent=5 // pred_check
        _
      $region10: #{tpu_custom_call.1} parent=5 // pred_check_branch
        %187 = sbr.rel (%p184) target = $region12
      $region11: #{tpu_custom_call.1} parent=5 // pred_region
        %s188 = ssub.s32 %s19, 1
        // Predicated region
        $region13: #{tpu_custom_call.1} parent=11 // pred_check
          %p189 = pneg %p125
        $region14: #{tpu_custom_call.1} parent=11 // pred_check_branch
          %191 = sbr.rel (%p189) target = $region16
        $region15: #{tpu_custom_call.1} parent=11 // pred_region
          %s193 = ssub.s32 2048, 2048
          %194 = vsyncadd [#allocation7], %s193
          %s195 = sshll.u32 [#allocation8], 4
          %s196 = int_to_ptr.vmem [resolvable:$true] %s195
          %201 = dma.hbm_to_vmem [thread:$0]  %s2, 2048, %s196, [#allocation7], 128, 128, 8
        $region16: #{tpu_custom_call.1} parent=11 // pred_fallthru
          _
        // Predicated region
        $region17: #{tpu_custom_call.1} parent=11 // pred_check
          %p202 = pneg %p146
        $region18: #{tpu_custom_call.1} parent=11 // pred_check_branch
          %204 = sbr.rel (%p202) target = $region20
        $region19: #{tpu_custom_call.1} parent=11 // pred_region
          _
        $region20: #{tpu_custom_call.1} parent=11 // pred_fallthru
          _
      $region12: #{tpu_custom_call.1} parent=5 // pred_fallthru
        _
      %p205 = scmp.lt.s32.totalorder %s19, 2
      // Predicated region
      $region21: #{tpu_custom_call.1} parent=5 // pred_check
        %p206 = pneg %p205
      $region22: #{tpu_custom_call.1} parent=5 // pred_check_branch
        %208 = sbr.rel (%p206) target = $region24
      $region23: #{tpu_custom_call.1} parent=5 // pred_region
        // Predicated region
        $region25: #{tpu_custom_call.1} parent=23 // pred_check
          %p209 = pneg %p68
        $region26: #{tpu_custom_call.1} parent=23 // pred_check_branch
          %211 = sbr.rel (%p209) target = $region28
        $region27: #{tpu_custom_call.1} parent=23 // pred_region
          %s212 = sand.u32 %s58, 1
          %s213 = scalar_lea.sflag [#allocation4], %s212
          %s214 = sand.u32 %s58, 1
          %s215 = smul.addr %s214, 128
          %s216 = scalar_lea.vmem [#allocation3], %s215
          %s217 = ssub.s32 1, %s27
          %p218 = scmp.gt.s32.totalorder %s217, 0
          %s219 = scalar_select %p218, %s217, 0
          %s220 = smul.u32 %s28, %s219
          %s221 = smul.u32 16, %s220
          %s223 = ssub.s32 2048, 2048
          %224 = vsyncadd %s213, %s223
          %s225 = smul.addr %s26, 16
          %s226 = sadd.s32 %s221, %s225
          %s227 = smul.addr %s226, 128
          %s228 = scalar_lea.hbm %s0, %s227
          %s229 = sshll.u32 %s216, 4
          %s230 = int_to_ptr.vmem [resolvable:$true] %s229
          %235 = dma.hbm_to_vmem [thread:$0]  %s228, 2048, %s230, %s213, 128, 128, 8
        $region28: #{tpu_custom_call.1} parent=23 // pred_fallthru
          _
        // Predicated region
        $region29: #{tpu_custom_call.1} parent=23 // pred_check
          %p236 = pneg %p98
        $region30: #{tpu_custom_call.1} parent=23 // pred_check_branch
          %238 = sbr.rel (%p236) target = $region32
        $region31: #{tpu_custom_call.1} parent=23 // pred_region
          %s239 = sand.u32 %s19, 1
          %s240 = scalar_lea.sflag [#allocation7], %s239
          %s241 = sand.u32 %s88, 1
          %s242 = smul.addr %s241, 128
          %s243 = scalar_lea.vmem [#allocation6], %s242
          %s244 = smul.u32 16, %s27
          %s246 = ssub.s32 2048, 2048
          %247 = vsyncadd %s240, %s246
          %s248 = sadd.s32 %s28, %s244
          %s249 = smul.addr %s26, 16
          %s250 = sadd.s32 %s248, %s249
          %s251 = smul.addr %s250, 128
          %s252 = scalar_lea.hbm %s1, %s251
          %s253 = sshll.u32 %s243, 4
          %s254 = int_to_ptr.vmem [resolvable:$true] %s253
          %259 = dma.hbm_to_vmem [thread:$0]  %s252, 2048, %s254, %s240, 128, 128, 8
        $region32: #{tpu_custom_call.1} parent=23 // pred_fallthru
          _
      $region24: #{tpu_custom_call.1} parent=5 // pred_fallthru
        _
      %p260 = scmp.le.s32.totalorder 1, %s19
      %p261 = scmp.lt.s32.totalorder %s19, 3
      %p262 = pnand %p260, %p261
      %p263 = pneg %p262
      // Predicated region
      $region33: #{tpu_custom_call.1} parent=5 // pred_check
        _
      $region34: #{tpu_custom_call.1} parent=5 // pred_check_branch
        %265 = sbr.rel (%p262) target = $region36
      $region35: #{tpu_custom_call.1} parent=5 // pred_region
        %s266 = ssub.s32 %s19, 1
        %s267 = sand.u32 %s61, 1
        %s268 = scalar_lea.sflag [#allocation4], %s267
        %s269 = sand.u32 %s61, 1
        %s270 = smul.addr %s269, 128
        %s271 = scalar_lea.vmem [#allocation3], %s270
        // Predicated region
        $region37: #{tpu_custom_call.1} parent=35 // pred_check
          %p272 = pneg %p74
        $region38: #{tpu_custom_call.1} parent=35 // pred_check_branch
          %274 = sbr.rel (%p272) target = $region40
        $region39: #{tpu_custom_call.1} parent=35 // pred_region
          %275 = dma.done %s268, 2048
        $region40: #{tpu_custom_call.1} parent=35 // pred_fallthru
          _
        %s276 = sand.u32 %s24, 1
        %s277 = scalar_lea.sflag [#allocation7], %s276
        %s278 = sand.u32 %s91, 1
        %s279 = smul.addr %s278, 128
        %s280 = scalar_lea.vmem [#allocation6], %s279
        // Predicated region
        $region41: #{tpu_custom_call.1} parent=35 // pred_check
          %p281 = pneg %p104
        $region42: #{tpu_custom_call.1} parent=35 // pred_check_branch
          %283 = sbr.rel (%p281) target = $region44
        $region43: #{tpu_custom_call.1} parent=35 // pred_region
          %284 = dma.done %s277, 2048
        $region44: #{tpu_custom_call.1} parent=35 // pred_fallthru
          _
        // Predicated region
        $region45: #{tpu_custom_call.1} parent=35 // pred_check
          %p285 = pneg %p125
        $region46: #{tpu_custom_call.1} parent=35 // pred_check_branch
          %287 = sbr.rel (%p285) target = $region48
        $region47: #{tpu_custom_call.1} parent=35 // pred_region
          %288 = dma.done [#allocation7], 2048
        $region48: #{tpu_custom_call.1} parent=35 // pred_fallthru
          _
        %s289 = sand.u32 %s61, 1
        %s290 = scalar_lea.sflag [#allocation4], %s289
        %s291 = sand.u32 %s61, 1
        %s292 = smul.addr %s291, 128
        %s293 = scalar_lea.vmem [#allocation3], %s292
        %p294 = pneg %p74
        %p295 = pneg %p71
        %s296 = sand.u32 %s24, 1
        %s297 = scalar_lea.sflag [#allocation7], %s296
        %s298 = sand.u32 %s91, 1
        %s299 = smul.addr %s298, 128
        %s300 = scalar_lea.vmem [#allocation6], %s299
        %p301 = pneg %p104
        %p302 = pneg %p101
        %p303 = pneg %p125
        %p304 = pneg %p122
        %p305 = pneg %p146
        %p306 = pneg %p143
        %p307 = pneg %p174
        %p308 = pneg %p171
        %s309 = sand.u32 %s161, 1
        %s310 = scalar_lea.sflag [#allocation5], %s309
        %s311 = sand.u32 %s161, 1
        %s312 = smul.addr %s311, 128
        %s313 = scalar_lea.vmem [#allocation9], %s312
        %s314 = ssub.s32 1, %s30
        %p315 = scmp.gt.s32.totalorder %s314, 0
        %s316 = scalar_select %p315, %s314, 0
        %s317 = smul.u32 %s31, %s316
        %s318 = smul.u32 16, %s317
        %s319 = smul.u32 16, %s30
        %s320 = smul.u32 16, %s30
        %s321 = smul.u32 %s31, 128
        %p322 = scmp.eq.s32.totalorder %s30, 0
        // Predicated region
        $region49: #{tpu_custom_call.1} parent=35 // pred_check
          %p323 = pneg %p322
        $region50: #{tpu_custom_call.1} parent=35 // pred_check_branch
          %325 = sbr.rel (%p323) target = $region52
        $region51: #{tpu_custom_call.1} parent=35 // pred_region
          %v326 = vld [vmem:[%s271] sm:$0xff]
          %v327 = vld [vmem:[%s271 + $0x8] sm:$0xff]
          %v328 = vld [vmem:[%s271 + $0x10] sm:$0xff]
          %v329 = vld [vmem:[%s271 + $0x18] sm:$0xff]
          %v330 = vld [vmem:[%s271 + $0x20] sm:$0xff]
          %v331 = vld [vmem:[%s271 + $0x28] sm:$0xff]
          %v332 = vld [vmem:[%s271 + $0x30] sm:$0xff]
          %v333 = vld [vmem:[%s271 + $0x38] sm:$0xff]
          %v334 = vld [vmem:[%s271 + $0x40] sm:$0xff]
          %v335 = vld [vmem:[%s271 + $0x48] sm:$0xff]
          %v336 = vld [vmem:[%s271 + $0x50] sm:$0xff]
          %v337 = vld [vmem:[%s271 + $0x58] sm:$0xff]
          %v338 = vld [vmem:[%s271 + $0x60] sm:$0xff]
          %v339 = vld [vmem:[%s271 + $0x68] sm:$0xff]
          %v340 = vld [vmem:[%s271 + $0x70] sm:$0xff]
          %v341 = vld [vmem:[%s271 + $0x78] sm:$0xff]
          %v342 = vld [vmem:[#allocation8] sm:$0xff]
          %v343 = vld [vmem:[#allocation8 + $0x8] sm:$0xff]
          %v344 = vld [vmem:[#allocation8 + $0x10] sm:$0xff]
          %v345 = vld [vmem:[#allocation8 + $0x18] sm:$0xff]
          %v346 = vld [vmem:[#allocation8 + $0x20] sm:$0xff]
          %v347 = vld [vmem:[#allocation8 + $0x28] sm:$0xff]
          %v348 = vld [vmem:[#allocation8 + $0x30] sm:$0xff]
          %v349 = vld [vmem:[#allocation8 + $0x38] sm:$0xff]
          %v350 = vld [vmem:[#allocation8 + $0x40] sm:$0xff]
          %v351 = vld [vmem:[#allocation8 + $0x48] sm:$0xff]
          %v352 = vld [vmem:[#allocation8 + $0x50] sm:$0xff]
          %v353 = vld [vmem:[#allocation8 + $0x58] sm:$0xff]
          %v354 = vld [vmem:[#allocation8 + $0x60] sm:$0xff]
          %v355 = vld [vmem:[#allocation8 + $0x68] sm:$0xff]
          %v356 = vld [vmem:[#allocation8 + $0x70] sm:$0xff]
          %v357 = vld [vmem:[#allocation8 + $0x78] sm:$0xff]
          %358 = vmatprep.subr.mxu0 0.0
          %359 = vmatpush1.msra.mxu0 %v357
          %360 = vmatprep.subr.mxu0 0.0
          %361 = vmatpush1.msra.mxu0 %v356
          %362 = vmatprep.subr.mxu0 0.0
          %363 = vmatpush1.msra.mxu0 %v355
          %364 = vmatprep.subr.mxu0 0.0
          %365 = vmatpush1.msra.mxu0 %v354
          %366 = vmatprep.subr.mxu0 0.0
          %367 = vmatpush1.msra.mxu0 %v353
          %368 = vmatprep.subr.mxu0 0.0
          %369 = vmatpush1.msra.mxu0 %v352
          %370 = vmatprep.subr.mxu0 0.0
          %371 = vmatpush1.msra.mxu0 %v351
          %372 = vmatprep.subr.mxu0 0.0
          %373 = vmatpush1.msra.mxu0 %v350
          %374 = vmatprep.subr.mxu0 0.0
          %375 = vmatpush1.msra.mxu0 %v349
          %376 = vmatprep.subr.mxu0 0.0
          %377 = vmatpush1.msra.mxu0 %v348
          %378 = vmatprep.subr.mxu0 0.0
          %379 = vmatpush1.msra.mxu0 %v347
          %380 = vmatprep.subr.mxu0 0.0
          %381 = vmatpush1.msra.mxu0 %v346
          %382 = vmatprep.subr.mxu0 0.0
          %383 = vmatpush1.msra.mxu0 %v345
          %384 = vmatprep.subr.mxu0 0.0
          %385 = vmatpush1.msra.mxu0 %v344
          %386 = vmatprep.subr.mxu0 0.0
          %387 = vmatpush1.msra.mxu0 %v343
          %388 = vmatprep.subr.mxu0 0.0
          %389 = vmatpush1.msra.mxu0 %v342
          %390 = vmatprep.subr.mxu0 0.0
          %391 = vmatpush2.msra.mxu0 0.0
          %392 = vmatprep.subr.mxu0 0.0
          %393 = vmatpush2.msra.mxu0 0.0
          %394 = vmatprep.subr.mxu0 0.0
          %395 = vmatpush2.msra.mxu0 0.0
          %396 = vmatprep.subr.mxu0 0.0
          %397 = vmatpush2.msra.mxu0 0.0
          %398 = vmatprep.subr.mxu0 0.0
          %399 = vmatpush2.msra.mxu0 0.0
          %400 = vmatprep.subr.mxu0 0.0
          %401 = vmatpush2.msra.mxu0 0.0
          %402 = vmatprep.subr.mxu0 0.0
          %403 = vmatpush2.msra.mxu0 0.0
          %404 = vmatprep.subr.mxu0 0.0
          %405 = vmatpush2.msra.mxu0 0.0
          %406 = vmatprep.subr.mxu0 0.0
          %407 = vmatpush2.msra.mxu0 0.0
          %408 = vmatprep.subr.mxu0 0.0
          %409 = vmatpush2.msra.mxu0 0.0
          %410 = vmatprep.subr.mxu0 0.0
          %411 = vmatpush2.msra.mxu0 0.0
          %412 = vmatprep.subr.mxu0 0.0
          %413 = vmatpush2.msra.mxu0 0.0
          %414 = vmatprep.subr.mxu0 0.0
          %415 = vmatpush2.msra.mxu0 0.0
          %416 = vmatprep.subr.mxu0 0.0
          %417 = vmatpush2.msra.mxu0 0.0
          %418 = vmatprep.subr.mxu0 0.0
          %419 = vmatpush2.msra.mxu0 0.0
          %420 = vmatprep.subr.mxu0 0.0
          %421 = vmatpush2.msra.mxu0 0.0
          %422 = vmatprep.mubr.f32.mxu0 0.0
          %423 = vmatmul.mubr.f32.gmra.mxu0 %v326
          %v424 = vpop.f32.mrf.mxu0
          %v425 = vadd.f32 0.0, %v424
          %v426 = vpop.f32.mrf.mxu0
          %427 = vmatprep.mubr.f32.mxu0 0.0
          %428 = vmatmul.mubr.f32.gmra.mxu0 %v327
          %v429 = vpop.f32.mrf.mxu0
          %v430 = vadd.f32 0.0, %v429
          %v431 = vpop.f32.mrf.mxu0
          %432 = vmatprep.mubr.f32.mxu0 0.0
          %433 = vmatmul.mubr.f32.gmra.mxu0 %v328
          %v434 = vpop.f32.mrf.mxu0
          %v435 = vadd.f32 0.0, %v434
          %v436 = vpop.f32.mrf.mxu0
          %437 = vmatprep.mubr.f32.mxu0 0.0
          %438 = vmatmul.mubr.f32.gmra.mxu0 %v329
          %v439 = vpop.f32.mrf.mxu0
          %v440 = vadd.f32 0.0, %v439
          %v441 = vpop.f32.mrf.mxu0
          %442 = vmatprep.mubr.f32.mxu0 0.0
          %443 = vmatmul.mubr.f32.gmra.mxu0 %v330
          %v444 = vpop.f32.mrf.mxu0
          %v445 = vadd.f32 0.0, %v444
          %v446 = vpop.f32.mrf.mxu0
          %447 = vmatprep.mubr.f32.mxu0 0.0
          %448 = vmatmul.mubr.f32.gmra.mxu0 %v331
          %v449 = vpop.f32.mrf.mxu0
          %v450 = vadd.f32 0.0, %v449
          %v451 = vpop.f32.mrf.mxu0
          %452 = vmatprep.mubr.f32.mxu0 0.0
          %453 = vmatmul.mubr.f32.gmra.mxu0 %v332
          %v454 = vpop.f32.mrf.mxu0
          %v455 = vadd.f32 0.0, %v454
          %v456 = vpop.f32.mrf.mxu0
          %457 = vmatprep.mubr.f32.mxu0 0.0
          %458 = vmatmul.mubr.f32.gmra.mxu0 %v333
          %v459 = vpop.f32.mrf.mxu0
          %v460 = vadd.f32 0.0, %v459
          %v461 = vpop.f32.mrf.mxu0
          %462 = vmatprep.mubr.f32.mxu0 0.0
          %463 = vmatmul.mubr.f32.gmra.mxu0 %v334
          %v464 = vpop.f32.mrf.mxu0
          %v465 = vadd.f32 0.0, %v464
          %v466 = vpop.f32.mrf.mxu0
          %467 = vmatprep.mubr.f32.mxu0 0.0
          %468 = vmatmul.mubr.f32.gmra.mxu0 %v335
          %v469 = vpop.f32.mrf.mxu0
          %v470 = vadd.f32 0.0, %v469
          %v471 = vpop.f32.mrf.mxu0
          %472 = vmatprep.mubr.f32.mxu0 0.0
          %473 = vmatmul.mubr.f32.gmra.mxu0 %v336
          %v474 = vpop.f32.mrf.mxu0
          %v475 = vadd.f32 0.0, %v474
          %v476 = vpop.f32.mrf.mxu0
          %477 = vmatprep.mubr.f32.mxu0 0.0
          %478 = vmatmul.mubr.f32.gmra.mxu0 %v337
          %v479 = vpop.f32.mrf.mxu0
          %v480 = vadd.f32 0.0, %v479
          %v481 = vpop.f32.mrf.mxu0
          %482 = vmatprep.mubr.f32.mxu0 0.0
          %483 = vmatmul.mubr.f32.gmra.mxu0 %v338
          %v484 = vpop.f32.mrf.mxu0
          %v485 = vadd.f32 0.0, %v484
          %v486 = vpop.f32.mrf.mxu0
          %487 = vmatprep.mubr.f32.mxu0 0.0
          %488 = vmatmul.mubr.f32.gmra.mxu0 %v339
          %v489 = vpop.f32.mrf.mxu0
          %v490 = vadd.f32 0.0, %v489
          %v491 = vpop.f32.mrf.mxu0
          %492 = vmatprep.mubr.f32.mxu0 0.0
          %493 = vmatmul.mubr.f32.gmra.mxu0 %v340
          %v494 = vpop.f32.mrf.mxu0
          %v495 = vadd.f32 0.0, %v494
          %v496 = vpop.f32.mrf.mxu0
          %497 = vmatprep.mubr.f32.mxu0 0.0
          %498 = vmatmul.mubr.f32.gmra.mxu0 %v341
          %v499 = vpop.f32.mrf.mxu0
          %v500 = vadd.f32 0.0, %v499
          %v501 = vpop.f32.mrf.mxu0
          %502 = vdwg.mxu0
          %s503 = scalar_lea.vmem [#allocation2], %s321
          %504 = vst [vmem:[%s503] sm:$0xff] %v425
          %505 = vst [vmem:[%s503 + $0x8] sm:$0xff] %v430
          %506 = vst [vmem:[%s503 + $0x10] sm:$0xff] %v435
          %507 = vst [vmem:[%s503 + $0x18] sm:$0xff] %v440
          %508 = vst [vmem:[%s503 + $0x20] sm:$0xff] %v445
          %509 = vst [vmem:[%s503 + $0x28] sm:$0xff] %v450
          %510 = vst [vmem:[%s503 + $0x30] sm:$0xff] %v455
          %511 = vst [vmem:[%s503 + $0x38] sm:$0xff] %v460
          %512 = vst [vmem:[%s503 + $0x40] sm:$0xff] %v465
          %513 = vst [vmem:[%s503 + $0x48] sm:$0xff] %v470
          %514 = vst [vmem:[%s503 + $0x50] sm:$0xff] %v475
          %515 = vst [vmem:[%s503 + $0x58] sm:$0xff] %v480
          %516 = vst [vmem:[%s503 + $0x60] sm:$0xff] %v485
          %517 = vst [vmem:[%s503 + $0x68] sm:$0xff] %v490
          %518 = vst [vmem:[%s503 + $0x70] sm:$0xff] %v495
          %519 = vst [vmem:[%s503 + $0x78] sm:$0xff] %v500
        $region52: #{tpu_custom_call.1} parent=35 // pred_fallthru
          _
        %v520 = vld [vmem:[%s280] sm:$0xff]
        %v521 = vld [vmem:[%s280 + $0x8] sm:$0xff]
        %v522 = vld [vmem:[%s280 + $0x10] sm:$0xff]
        %v523 = vld [vmem:[%s280 + $0x18] sm:$0xff]
        %v524 = vld [vmem:[%s280 + $0x20] sm:$0xff]
        %v525 = vld [vmem:[%s280 + $0x28] sm:$0xff]
        %v526 = vld [vmem:[%s280 + $0x30] sm:$0xff]
        %v527 = vld [vmem:[%s280 + $0x38] sm:$0xff]
        %v528 = vld [vmem:[%s280 + $0x40] sm:$0xff]
        %v529 = vld [vmem:[%s280 + $0x48] sm:$0xff]
        %v530 = vld [vmem:[%s280 + $0x50] sm:$0xff]
        %v531 = vld [vmem:[%s280 + $0x58] sm:$0xff]
        %v532 = vld [vmem:[%s280 + $0x60] sm:$0xff]
        %v533 = vld [vmem:[%s280 + $0x68] sm:$0xff]
        %v534 = vld [vmem:[%s280 + $0x70] sm:$0xff]
        %v535 = vld [vmem:[%s280 + $0x78] sm:$0xff]
        %s536 = scalar_lea.vmem [#allocation2], %s321
        %v537 = vld [vmem:[%s536] sm:$0xff]
        %v538 = vld [vmem:[%s536 + $0x8] sm:$0xff]
        %v539 = vld [vmem:[%s536 + $0x10] sm:$0xff]
        %v540 = vld [vmem:[%s536 + $0x18] sm:$0xff]
        %v541 = vld [vmem:[%s536 + $0x20] sm:$0xff]
        %v542 = vld [vmem:[%s536 + $0x28] sm:$0xff]
        %v543 = vld [vmem:[%s536 + $0x30] sm:$0xff]
        %v544 = vld [vmem:[%s536 + $0x38] sm:$0xff]
        %v545 = vld [vmem:[%s536 + $0x40] sm:$0xff]
        %v546 = vld [vmem:[%s536 + $0x48] sm:$0xff]
        %v547 = vld [vmem:[%s536 + $0x50] sm:$0xff]
        %v548 = vld [vmem:[%s536 + $0x58] sm:$0xff]
        %v549 = vld [vmem:[%s536 + $0x60] sm:$0xff]
        %v550 = vld [vmem:[%s536 + $0x68] sm:$0xff]
        %v551 = vld [vmem:[%s536 + $0x70] sm:$0xff]
        %v552 = vld [vmem:[%s536 + $0x78] sm:$0xff]
        %v553 = vld [vmem:[%s3] sm:$0x1]
        %v555 = vlaneseq
        %v556 = vshrl.u32 %v555, 7
        %v557 = vsub.s32 0, %v556
        %v558 = vrot.slane %v553, %v557
        %560 = vmatprep.subr.mxu0 0.0
        %561 = vmatpush1.msra.mxu0 %v552
        %562 = vmatprep.subr.mxu0 0.0
        %563 = vmatpush1.msra.mxu0 %v551
        %564 = vmatprep.subr.mxu0 0.0
        %565 = vmatpush1.msra.mxu0 %v550
        %566 = vmatprep.subr.mxu0 0.0
        %567 = vmatpush1.msra.mxu0 %v549
        %568 = vmatprep.subr.mxu0 0.0
        %569 = vmatpush1.msra.mxu0 %v548
        %570 = vmatprep.subr.mxu0 0.0
        %571 = vmatpush1.msra.mxu0 %v547
        %572 = vmatprep.subr.mxu0 0.0
        %573 = vmatpush1.msra.mxu0 %v546
        %574 = vmatprep.subr.mxu0 0.0
        %575 = vmatpush1.msra.mxu0 %v545
        %576 = vmatprep.subr.mxu0 0.0
        %577 = vmatpush1.msra.mxu0 %v544
        %578 = vmatprep.subr.mxu0 0.0
        %579 = vmatpush1.msra.mxu0 %v543
        %580 = vmatprep.subr.mxu0 0.0
        %581 = vmatpush1.msra.mxu0 %v542
        %582 = vmatprep.subr.mxu0 0.0
        %583 = vmatpush1.msra.mxu0 %v541
        %584 = vmatprep.subr.mxu0 0.0
        %585 = vmatpush1.msra.mxu0 %v540
        %586 = vmatprep.subr.mxu0 0.0
        %587 = vmatpush1.msra.mxu0 %v539
        %588 = vmatprep.subr.mxu0 0.0
        %589 = vmatpush1.msra.mxu0 %v538
        %590 = vmatprep.subr.mxu0 0.0
        %591 = vmatpush1.msra.mxu0 %v537
        %592 = vmatprep.subr.mxu0 0.0
        %593 = vmatpush2.msra.mxu0 0.0
        %594 = vmatprep.subr.mxu0 0.0
        %595 = vmatpush2.msra.mxu0 0.0
        %596 = vmatprep.subr.mxu0 0.0
        %597 = vmatpush2.msra.mxu0 0.0
        %598 = vmatprep.subr.mxu0 0.0
        %599 = vmatpush2.msra.mxu0 0.0
        %600 = vmatprep.subr.mxu0 0.0
        %601 = vmatpush2.msra.mxu0 0.0
        %602 = vmatprep.subr.mxu0 0.0
        %603 = vmatpush2.msra.mxu0 0.0
        %604 = vmatprep.subr.mxu0 0.0
        %605 = vmatpush2.msra.mxu0 0.0
        %606 = vmatprep.subr.mxu0 0.0
        %607 = vmatpush2.msra.mxu0 0.0
        %608 = vmatprep.subr.mxu0 0.0
        %609 = vmatpush2.msra.mxu0 0.0
        %610 = vmatprep.subr.mxu0 0.0
        %611 = vmatpush2.msra.mxu0 0.0
        %612 = vmatprep.subr.mxu0 0.0
        %613 = vmatpush2.msra.mxu0 0.0
        %614 = vmatprep.subr.mxu0 0.0
        %615 = vmatpush2.msra.mxu0 0.0
        %616 = vmatprep.subr.mxu0 0.0
        %617 = vmatpush2.msra.mxu0 0.0
        %618 = vmatprep.subr.mxu0 0.0
        %619 = vmatpush2.msra.mxu0 0.0
        %620 = vmatprep.subr.mxu0 0.0
        %621 = vmatpush2.msra.mxu0 0.0
        %622 = vmatprep.subr.mxu0 0.0
        %623 = vmatpush2.msra.mxu0 0.0
        %624 = vmatprep.mubr.f32.mxu0 0.0
        %625 = vmatmul.mubr.f32.gmra.mxu0 %v520
        %v626 = vpop.f32.mrf.mxu0
        %v627 = vadd.f32 %v558, %v626
        %v628 = vpop.f32.mrf.mxu0
        %629 = vmatprep.mubr.f32.mxu0 0.0
        %630 = vmatmul.mubr.f32.gmra.mxu0 %v521
        %v631 = vpop.f32.mrf.mxu0
        %v632 = vadd.f32 %v558, %v631
        %v633 = vpop.f32.mrf.mxu0
        %634 = vmatprep.mubr.f32.mxu0 0.0
        %635 = vmatmul.mubr.f32.gmra.mxu0 %v522
        %v636 = vpop.f32.mrf.mxu0
        %v637 = vadd.f32 %v558, %v636
        %v638 = vpop.f32.mrf.mxu0
        %639 = vmatprep.mubr.f32.mxu0 0.0
        %640 = vmatmul.mubr.f32.gmra.mxu0 %v523
        %v641 = vpop.f32.mrf.mxu0
        %v642 = vadd.f32 %v558, %v641
        %v643 = vpop.f32.mrf.mxu0
        %644 = vmatprep.mubr.f32.mxu0 0.0
        %645 = vmatmul.mubr.f32.gmra.mxu0 %v524
        %v646 = vpop.f32.mrf.mxu0
        %v647 = vadd.f32 %v558, %v646
        %v648 = vpop.f32.mrf.mxu0
        %649 = vmatprep.mubr.f32.mxu0 0.0
        %650 = vmatmul.mubr.f32.gmra.mxu0 %v525
        %v651 = vpop.f32.mrf.mxu0
        %v652 = vadd.f32 %v558, %v651
        %v653 = vpop.f32.mrf.mxu0
        %654 = vmatprep.mubr.f32.mxu0 0.0
        %655 = vmatmul.mubr.f32.gmra.mxu0 %v526
        %v656 = vpop.f32.mrf.mxu0
        %v657 = vadd.f32 %v558, %v656
        %v658 = vpop.f32.mrf.mxu0
        %659 = vmatprep.mubr.f32.mxu0 0.0
        %660 = vmatmul.mubr.f32.gmra.mxu0 %v527
        %v661 = vpop.f32.mrf.mxu0
        %v662 = vadd.f32 %v558, %v661
        %v663 = vpop.f32.mrf.mxu0
        %664 = vmatprep.mubr.f32.mxu0 0.0
        %665 = vmatmul.mubr.f32.gmra.mxu0 %v528
        %v666 = vpop.f32.mrf.mxu0
        %v667 = vadd.f32 %v558, %v666
        %v668 = vpop.f32.mrf.mxu0
        %669 = vmatprep.mubr.f32.mxu0 0.0
        %670 = vmatmul.mubr.f32.gmra.mxu0 %v529
        %v671 = vpop.f32.mrf.mxu0
        %v672 = vadd.f32 %v558, %v671
        %v673 = vpop.f32.mrf.mxu0
        %674 = vmatprep.mubr.f32.mxu0 0.0
        %675 = vmatmul.mubr.f32.gmra.mxu0 %v530
        %v676 = vpop.f32.mrf.mxu0
        %v677 = vadd.f32 %v558, %v676
        %v678 = vpop.f32.mrf.mxu0
        %679 = vmatprep.mubr.f32.mxu0 0.0
        %680 = vmatmul.mubr.f32.gmra.mxu0 %v531
        %v681 = vpop.f32.mrf.mxu0
        %v682 = vadd.f32 %v558, %v681
        %v683 = vpop.f32.mrf.mxu0
        %684 = vmatprep.mubr.f32.mxu0 0.0
        %685 = vmatmul.mubr.f32.gmra.mxu0 %v532
        %v686 = vpop.f32.mrf.mxu0
        %v687 = vadd.f32 %v558, %v686
        %v688 = vpop.f32.mrf.mxu0
        %689 = vmatprep.mubr.f32.mxu0 0.0
        %690 = vmatmul.mubr.f32.gmra.mxu0 %v533
        %v691 = vpop.f32.mrf.mxu0
        %v692 = vadd.f32 %v558, %v691
        %v693 = vpop.f32.mrf.mxu0
        %694 = vmatprep.mubr.f32.mxu0 0.0
        %695 = vmatmul.mubr.f32.gmra.mxu0 %v534
        %v696 = vpop.f32.mrf.mxu0
        %v697 = vadd.f32 %v558, %v696
        %v698 = vpop.f32.mrf.mxu0
        %699 = vmatprep.mubr.f32.mxu0 0.0
        %700 = vmatmul.mubr.f32.gmra.mxu0 %v535
        %v701 = vpop.f32.mrf.mxu0
        %v702 = vadd.f32 %v558, %v701
        %v703 = vpop.f32.mrf.mxu0
        %704 = vdwg.mxu0
        %705 = vst [vmem:[%s313] sm:$0xff] %v627
        %706 = vst [vmem:[%s313 + $0x8] sm:$0xff] %v632
        %707 = vst [vmem:[%s313 + $0x10] sm:$0xff] %v637
        %708 = vst [vmem:[%s313 + $0x18] sm:$0xff] %v642
        %709 = vst [vmem:[%s313 + $0x20] sm:$0xff] %v647
        %710 = vst [vmem:[%s313 + $0x28] sm:$0xff] %v652
        %711 = vst [vmem:[%s313 + $0x30] sm:$0xff] %v657
        %712 = vst [vmem:[%s313 + $0x38] sm:$0xff] %v662
        %713 = vst [vmem:[%s313 + $0x40] sm:$0xff] %v667
        %714 = vst [vmem:[%s313 + $0x48] sm:$0xff] %v672
        %715 = vst [vmem:[%s313 + $0x50] sm:$0xff] %v677
        %716 = vst [vmem:[%s313 + $0x58] sm:$0xff] %v682
        %717 = vst [vmem:[%s313 + $0x60] sm:$0xff] %v687
        %718 = vst [vmem:[%s313 + $0x68] sm:$0xff] %v692
        %719 = vst [vmem:[%s313 + $0x70] sm:$0xff] %v697
        %720 = vst [vmem:[%s313 + $0x78] sm:$0xff] %v702
        %s721 = sand.u32 %s161, 1
        %s722 = scalar_lea.sflag [#allocation5], %s721
        %s723 = sand.u32 %s161, 1
        %s724 = smul.addr %s723, 128
        %s725 = scalar_lea.vmem [#allocation9], %s724
        // Predicated region
        $region53: #{tpu_custom_call.1} parent=35 // pred_check
          %p726 = pneg %p171
        $region54: #{tpu_custom_call.1} parent=35 // pred_check_branch
          %728 = sbr.rel (%p726) target = $region56
        $region55: #{tpu_custom_call.1} parent=35 // pred_region
          %s729 = smul.u32 16, %s30
          %s731 = ssub.s32 2048, 2048
          %732 = vsyncadd %s722, %s731
          %s733 = smul.addr %s29, 16
          %s734 = sadd.s32 %s729, %s733
          %s735 = smul.addr %s734, 128
          %s736 = scalar_lea.hbm %s4, %s735
          %s737 = sshll.u32 %s725, 4
          %s738 = int_to_ptr.vmem [resolvable:$true] %s737
          %743 = dma.vmem_to_hbm [thread:$0]  %s738, 2048, %s736, %s722, 128, 128, 8
        $region56: #{tpu_custom_call.1} parent=35 // pred_fallthru
          _
      $region36: #{tpu_custom_call.1} parent=5 // pred_fallthru
        _
      %p744 = scmp.le.s32.totalorder 2, %s19
      // Predicated region
      $region57: #{tpu_custom_call.1} parent=5 // pred_check
        %p745 = pneg %p744
      $region58: #{tpu_custom_call.1} parent=5 // pred_check_branch
        %747 = sbr.rel (%p745) target = $region60
      $region59: #{tpu_custom_call.1} parent=5 // pred_region
        %s748 = ssub.s32 %s19, 2
        // Predicated region
        $region61: #{tpu_custom_call.1} parent=59 // pred_check
          %p749 = pneg %p177
        $region62: #{tpu_custom_call.1} parent=59 // pred_check_branch
          %751 = sbr.rel (%p749) target = $region64
        $region63: #{tpu_custom_call.1} parent=59 // pred_region
          %s752 = sand.u32 %s162, 1
          %s753 = scalar_lea.sflag [#allocation5], %s752
          %s754 = sand.u32 %s162, 1
          %s755 = smul.addr %s754, 128
          %s756 = scalar_lea.vmem [#allocation9], %s755
          %757 = dma.done %s753, 2048
        $region64: #{tpu_custom_call.1} parent=59 // pred_fallthru
          _
      $region60: #{tpu_custom_call.1} parent=5 // pred_fallthru
        _
    $region6: #{tpu_custom_call.1} parent=1 // loop_footer
      %s23 = sadd.s32 1, %s19
    $region7: #{tpu_custom_call.1} parent=1 // loop_footer_branch
      %18 = sbr.rel target = $region3
    $region8: #{tpu_custom_call.1} parent=1 // loop_exit
      _
    %758 = vsyncpa [#allocation4], 1
    %s759 = scalar_lea.sflag [#allocation4], 1
    %760 = vsyncpa %s759, 1
    %761 = vsyncpa [#allocation7], 1
    %s762 = scalar_lea.sflag [#allocation7], 1
    %763 = vsyncpa %s762, 1
    %764 = vsyncpa [#allocation5], 1
    %s765 = scalar_lea.sflag [#allocation5], 1
    %766 = vsyncpa %s765, 1

</llo_original>
